<compile_context>
chip_gen: v7x
topology: tpu7x:2x2x1
jax: 0.10.0
libtpu: 0.0.40
codegen_flags: <defaults>
</compile_context>

<pallas_src>
import functools

import jax
import jax.numpy as jnp
from jax.experimental import pallas as pl
from jax.experimental.pallas import tpu as pltpu


def _round_up(n, m):
    return ((n + m - 1) // m) * m


def _default_compute_dtype():
    """bf16 activations on chips with bf16 VPU/EUP (v6e / v7x); f32 elsewhere."""
    try:
        kind = jax.devices()[0].device_kind.lower()
    except Exception:
        return jnp.float32
    if "v6" in kind or "v7" in kind:
        return jnp.bfloat16
    return jnp.float32


def _make_pinn_kernel(n_hidden_layers, compute_dtype):
    # Pin MXU precision on the f32 path (PINN outputs are precision-sensitive;
    # default TPU matmul precision may demote f32 operands to bf16 passes).
    prec = (jax.lax.Precision.HIGHEST if compute_dtype == jnp.float32
            else jax.lax.Precision.DEFAULT)

    def kernel(x_ref, t_ref, w_ref, b_ref, o_ref):
        x = x_ref[...].astype(compute_dtype)    # (1, TB)  batch on lanes
        t = t_ref[...].astype(compute_dtype)    # (1, TB)

        # Layer 0: 2 -> H.  VPU broadcast mul-add (K=2 never touches the MXU).
        w0 = w_ref[0]                            # (PAD, PAD); only [:H, :2] non-zero
        h = jnp.tanh(w0[:, 0:1] * x + w0[:, 1:2] * t + b_ref[0])   # (PAD, TB)

        # Hidden layers: H -> H on the MXU (f32 internal accumulation).
        for l in range(1, n_hidden_layers + 1):
            h = jnp.tanh(
                jnp.dot(w_ref[l], h,
                        preferred_element_type=compute_dtype,
                        precision=prec)
                + b_ref[l])

        # Output layer: H -> 1, no activation.  Only row 0 of the slab is real.
        lo = n_hidden_layers + 1
        o_ref[...] = (
            jnp.dot(w_ref[lo][0:1, :], h,
                    preferred_element_type=jnp.float32, precision=prec)
            + b_ref[lo][0:1, 0:1].astype(jnp.float32)).astype(o_ref.dtype)

    return kernel


@functools.partial(jax.jit, static_argnames=("tile_b", "compute_dtype"))
def pinn_forward(x, t, params, *, tile_b=16384, compute_dtype=None):
    """x, t: (B, 1) float32.  Returns (B, 1) float32."""
    if compute_dtype is None:
        compute_dtype = _default_compute_dtype()

    w_slab, b_slab = params
    n_layers = w_slab.shape[0]
    n_hidden_layers = n_layers - 2
    pad = w_slab.shape[1]

    # Cast parameter slabs (tiny); zero padding stays exactly zero in bf16.
    w_slab = w_slab.astype(compute_dtype)
    b_slab = b_slab.astype(compute_dtype)

    b = x.shape[0]
    xr = x.reshape(1, b)                     # feature-major: batch on lanes
    tr = t.reshape(1, b)

    b128 = _round_up(b, 128)
    if b < 128:
        # Tiny batch: pad to one full 128-lane tile (cheap).  Larger batches are
        # left unpadded -- Pallas handles the ragged final block and the OOB
        # lanes are never read back.
        xr = jnp.pad(xr, ((0, 0), (0, b128 - b)))
        tr = jnp.pad(tr, ((0, 0), (0, b128 - b)))
        nb = b128
    else:
        nb = b

    # Batch tile: multiple of 128 lanes, and keep >= 2 grid steps when the batch
    # allows it (pipelines DMA with compute; shards across both TCs on v7x).
    tb = min(_round_up(tile_b, 128), b128)
    if tb >= b128 and b128 >= 256:
        tb = _round_up(pl.cdiv(b128, 2), 128)
    n_steps = pl.cdiv(nb, tb)

    out = pl.pallas_call(
        _make_pinn_kernel(n_hidden_layers, compute_dtype),
        out_shape=jax.ShapeDtypeStruct((1, nb), jnp.float32),
        grid_spec=pltpu.PrefetchScalarGridSpec(
            num_scalar_prefetch=0,
            grid=(n_steps,),
            in_specs=[
                pl.BlockSpec((1, tb), lambda i: (0, i)),                  # x
                pl.BlockSpec((1, tb), lambda i: (0, i)),                  # t
                pl.BlockSpec((n_layers, pad, pad), lambda i: (0, 0, 0)),  # W slab (VMEM-resident)
                pl.BlockSpec((n_layers, pad, 1), lambda i: (0, 0, 0)),    # b slab (VMEM-resident)
            ],
            out_specs=pl.BlockSpec((1, tb), lambda i: (0, i)),
        ),
        compiler_params=pltpu.CompilerParams(
            dimension_semantics=("parallel",)),   # shards grid across TCs on v7x
    )(xr, tr, w_slab, b_slab)

    return out[:, :b].reshape(b, 1)


def init_pinn_params(key, n_hidden_layers=2, n_neurons_per_layer=9):
    """PyTorch-equivalent init: xavier_normal_ weights, zero biases.

    Returns (w_slab, b_slab):
      w_slab: (L, PAD, PAD) f32; layer l weight stored (out, in) at [:out, :in],
              zero elsewhere (the zero padding keeps the kernel mask-free).
      b_slab: (L, PAD, 1) f32.
    """
    h = n_neurons_per_layer
    dims = [2] + [h] * (n_hidden_layers + 1) + [1]
    n_layers = len(dims) - 1
    pad = _round_up(max(h, 2), 8)
    keys = jax.random.split(key, n_layers)
    w_slab = jnp.zeros((n_layers, pad, pad), dtype=jnp.float32)
    b_slab = jnp.zeros((n_layers, pad, 1), dtype=jnp.float32)
    for l, (k, fan_in, fan_out) in enumerate(zip(keys, dims[:-1], dims[1:])):
        std = (2.0 / (fan_in + fan_out)) ** 0.5
        w = std * jax.random.normal(k, (fan_out, fan_in), dtype=jnp.float32)
        w_slab = w_slab.at[l, :fan_out, :fan_in].set(w)
    return (w_slab, b_slab)


def _reference_forward(x, t, params, n_neurons_per_layer=9):
    """Pure-JAX f32 reference (batch-major, like the PyTorch module)."""
    w_slab, b_slab = params
    n_layers = w_slab.shape[0]
    hdim = n_neurons_per_layer
    hid = jnp.concatenate([x, t], axis=1)                               # (B, 2)
    hid = jnp.tanh(hid @ w_slab[0, :hdim, :2].T + b_slab[0, :hdim, 0])
    for l in range(1, n_layers - 1):
        hid = jnp.tanh(hid @ w_slab[l, :hdim, :hdim].T + b_slab[l, :hdim, 0])
    return hid @ w_slab[n_layers - 1, :1, :hdim].T + b_slab[n_layers - 1, :1, 0]


if __name__ == "__main__":
    key = jax.random.PRNGKey(0)
    kp, kx, kt = jax.random.split(key, 3)

    params = init_pinn_params(kp, n_hidden_layers=2, n_neurons_per_layer=9)

    auto_dt = _default_compute_dtype()
    auto_tol = 1e-5 if auto_dt == jnp.float32 else 5e-2   # bf16 path is looser

    # Case 1: tiny batch (single padded 128-lane tile), auto dtype.
    x1 = jax.random.normal(kx, (8, 1), dtype=jnp.float32)
    t1 = jax.random.normal(kt, (8, 1), dtype=jnp.float32)
    out1 = jax.block_until_ready(pinn_forward(x1, t1, params))
    ref1 = _reference_forward(x1, t1, params)
    assert out1.shape == (8, 1), out1.shape
    assert jnp.allclose(out1, ref1, atol=auto_tol, rtol=auto_tol), (out1, ref1)

    # Case 2: B=300 -> 2 grid steps with an unpadded ragged final block, auto dtype.
    x2 = jax.random.normal(kx, (300, 1), dtype=jnp.float32)
    t2 = jax.random.normal(kt, (300, 1), dtype=jnp.float32)
    out2 = jax.block_until_ready(pinn_forward(x2, t2, params))
    ref2 = _reference_forward(x2, t2, params)
    assert out2.shape == (300, 1), out2.shape
    assert jnp.allclose(out2, ref2, atol=auto_tol, rtol=auto_tol), (out2, ref2)

    # Case 3: forced f32 path, small tile (3 grid steps, ragged last block), tight tol.
    out3 = jax.block_until_ready(
        pinn_forward(x2, t2, params, tile_b=128, compute_dtype=jnp.float32))
    assert out3.shape == (300, 1), out3.shape
    assert jnp.allclose(out3, ref2, atol=1e-5, rtol=1e-5), (out3, ref2)

    print("KERNEL_OK")
</pallas_src>

<mosaic_0001>
module attributes {stable_mosaic.version = 11 : i64} {
  func.func @kernel(%arg0: i32, %arg1: memref<1x128xf32, #tpu.memory_space<vmem>>, %arg2: memref<1x128xf32, #tpu.memory_space<vmem>>, %arg3: memref<4x16x16xf32, #tpu.memory_space<vmem>>, %arg4: memref<4x16x1xf32, #tpu.memory_space<vmem>>, %arg5: memref<1x128xf32, #tpu.memory_space<vmem>>) attributes {dimension_semantics = [#tpu.dimension_semantics<parallel>], iteration_bounds = array<i64: 1>, scalar_prefetch = 0 : i64, scratch_operands = 0 : i64, tpu.core_type = #tpu.core_type<tc>, window_params = [{transform_indices = @transform_0, window_bounds = array<i64: 1, 128>}, {transform_indices = @transform_1, window_bounds = array<i64: 1, 128>}, {pipeline_mode = #tpu.pipeline_mode<synchronous>, transform_indices = @transform_2, window_bounds = array<i64: 4, 16, 16>}, {pipeline_mode = #tpu.pipeline_mode<synchronous>, transform_indices = @transform_3, window_bounds = array<i64: 4, 16, 1>}, {transform_indices = @transform_4, window_bounds = array<i64: 1, 128>}]} {
    %c0 = arith.constant 0 : index
    %c0_0 = arith.constant 0 : index
    %0 = vector.load %arg1[%c0, %c0_0] : memref<1x128xf32, #tpu.memory_space<vmem>>, vector<1x128xf32>
    %c0_1 = arith.constant 0 : index
    %c0_2 = arith.constant 0 : index
    %1 = vector.load %arg2[%c0_1, %c0_2] : memref<1x128xf32, #tpu.memory_space<vmem>>, vector<1x128xf32>
    %c0_3 = arith.constant 0 : index
    %c0_4 = arith.constant 0 : index
    %c0_5 = arith.constant 0 : index
    %2 = vector.load %arg3[%c0_3, %c0_4, %c0_5] : memref<4x16x16xf32, #tpu.memory_space<vmem>>, vector<1x16x16xf32>
    %3 = vector.shape_cast %2 : vector<1x16x16xf32> to vector<16x16xf32>
    %4 = vector.extract_strided_slice %3 {offsets = [0, 0], sizes = [16, 1], strides = [1, 1]} : vector<16x16xf32> to vector<16x1xf32>
    %5 = vector.broadcast %4 : vector<16x1xf32> to vector<16x128xf32>
    %6 = vector.broadcast %0 : vector<1x128xf32> to vector<16x128xf32>
    %7 = arith.mulf %5, %6 : vector<16x128xf32>
    %8 = vector.extract_strided_slice %3 {offsets = [0, 1], sizes = [16, 1], strides = [1, 1]} : vector<16x16xf32> to vector<16x1xf32>
    %9 = vector.broadcast %8 : vector<16x1xf32> to vector<16x128xf32>
    %10 = vector.broadcast %1 : vector<1x128xf32> to vector<16x128xf32>
    %11 = arith.mulf %9, %10 : vector<16x128xf32>
    %12 = arith.addf %7, %11 : vector<16x128xf32>
    %c0_6 = arith.constant 0 : index
    %c0_7 = arith.constant 0 : index
    %c0_8 = arith.constant 0 : index
    %13 = vector.load %arg4[%c0_6, %c0_7, %c0_8] : memref<4x16x1xf32, #tpu.memory_space<vmem>>, vector<1x16x1xf32>
    %14 = vector.shape_cast %13 : vector<1x16x1xf32> to vector<16x1xf32>
    %15 = vector.broadcast %14 : vector<16x1xf32> to vector<16x128xf32>
    %16 = arith.addf %12, %15 : vector<16x128xf32>
    %17 = math.tanh %16 : vector<16x128xf32>
    %c1 = arith.constant 1 : index
    %c0_9 = arith.constant 0 : index
    %c0_10 = arith.constant 0 : index
    %18 = vector.load %arg3[%c1, %c0_9, %c0_10] : memref<4x16x16xf32, #tpu.memory_space<vmem>>, vector<1x16x16xf32>
    %19 = vector.shape_cast %18 : vector<1x16x16xf32> to vector<16x16xf32>
    %cst = arith.constant dense<0.000000e+00> : vector<16x128xf32>
    %20 = tpu.matmul %19, %17, %cst {dimension_numbers = #tpu.dot_dimension_numbers<[1], [0], [0], [1], [0, 0, 1, 1], [], []>, precision = #tpu.contract_precision<fp32>} : vector<16x16xf32>, vector<16x128xf32>, vector<16x128xf32> -> vector<16x128xf32>
    %c1_11 = arith.constant 1 : index
    %c0_12 = arith.constant 0 : index
    %c0_13 = arith.constant 0 : index
    %21 = vector.load %arg4[%c1_11, %c0_12, %c0_13] : memref<4x16x1xf32, #tpu.memory_space<vmem>>, vector<1x16x1xf32>
    %22 = vector.shape_cast %21 : vector<1x16x1xf32> to vector<16x1xf32>
    %23 = vector.broadcast %22 : vector<16x1xf32> to vector<16x128xf32>
    %24 = arith.addf %20, %23 : vector<16x128xf32>
    %25 = math.tanh %24 : vector<16x128xf32>
    %c2 = arith.constant 2 : index
    %c0_14 = arith.constant 0 : index
    %c0_15 = arith.constant 0 : index
    %26 = vector.load %arg3[%c2, %c0_14, %c0_15] : memref<4x16x16xf32, #tpu.memory_space<vmem>>, vector<1x16x16xf32>
    %27 = vector.shape_cast %26 : vector<1x16x16xf32> to vector<16x16xf32>
    %cst_16 = arith.constant dense<0.000000e+00> : vector<16x128xf32>
    %28 = tpu.matmul %27, %25, %cst_16 {dimension_numbers = #tpu.dot_dimension_numbers<[1], [0], [0], [1], [0, 0, 1, 1], [], []>, precision = #tpu.contract_precision<fp32>} : vector<16x16xf32>, vector<16x128xf32>, vector<16x128xf32> -> vector<16x128xf32>
    %c2_17 = arith.constant 2 : index
    %c0_18 = arith.constant 0 : index
    %c0_19 = arith.constant 0 : index
    %29 = vector.load %arg4[%c2_17, %c0_18, %c0_19] : memref<4x16x1xf32, #tpu.memory_space<vmem>>, vector<1x16x1xf32>
    %30 = vector.shape_cast %29 : vector<1x16x1xf32> to vector<16x1xf32>
    %31 = vector.broadcast %30 : vector<16x1xf32> to vector<16x128xf32>
    %32 = arith.addf %28, %31 : vector<16x128xf32>
    %33 = math.tanh %32 : vector<16x128xf32>
    %c3 = arith.constant 3 : index
    %c0_20 = arith.constant 0 : index
    %c0_21 = arith.constant 0 : index
    %34 = vector.load %arg3[%c3, %c0_20, %c0_21] : memref<4x16x16xf32, #tpu.memory_space<vmem>>, vector<1x16x16xf32>
    %35 = vector.shape_cast %34 : vector<1x16x16xf32> to vector<16x16xf32>
    %36 = vector.extract_strided_slice %35 {offsets = [0, 0], sizes = [1, 16], strides = [1, 1]} : vector<16x16xf32> to vector<1x16xf32>
    %cst_22 = arith.constant dense<0.000000e+00> : vector<1x128xf32>
    %37 = tpu.matmul %36, %33, %cst_22 {dimension_numbers = #tpu.dot_dimension_numbers<[1], [0], [0], [1], [0, 0, 1, 1], [], []>, precision = #tpu.contract_precision<fp32>} : vector<1x16xf32>, vector<16x128xf32>, vector<1x128xf32> -> vector<1x128xf32>
    %c3_23 = arith.constant 3 : index
    %c0_24 = arith.constant 0 : index
    %c0_25 = arith.constant 0 : index
    %38 = vector.load %arg4[%c3_23, %c0_24, %c0_25] : memref<4x16x1xf32, #tpu.memory_space<vmem>>, vector<1x16x1xf32>
    %39 = vector.shape_cast %38 : vector<1x16x1xf32> to vector<16x1xf32>
    %40 = vector.extract_strided_slice %39 {offsets = [0, 0], sizes = [1, 1], strides = [1, 1]} : vector<16x1xf32> to vector<1x1xf32>
    %41 = vector.broadcast %40 : vector<1x1xf32> to vector<1x128xf32>
    %42 = arith.addf %37, %41 : vector<1x128xf32>
    %c0_26 = arith.constant 0 : index
    %c0_27 = arith.constant 0 : index
    %43 = vector.load %arg5[%c0_26, %c0_27] : memref<1x128xf32, #tpu.memory_space<vmem>>, vector<1x128xf32>
    tpu.vector_store %arg5[%c0_26, %c0_27], %42 {strides = array<i32>} : memref<1x128xf32, #tpu.memory_space<vmem>>, vector<1x128xf32>,
    return
  }
  func.func @transform_0(%arg0: i32) -> (i32, i32) {
    %c0_i32 = arith.constant 0 : i32
    %c0_i32_0 = arith.constant 0 : i32
    return %c0_i32, %arg0 : i32, i32
  }
  func.func @transform_1(%arg0: i32) -> (i32, i32) {
    %c0_i32 = arith.constant 0 : i32
    %c0_i32_0 = arith.constant 0 : i32
    return %c0_i32, %arg0 : i32, i32
  }
  func.func @transform_2(%arg0: i32) -> (i32, i32, i32) {
    %c0_i32 = arith.constant 0 : i32
    %c0_i32_0 = arith.constant 0 : i32
    %c0_i32_1 = arith.constant 0 : i32
    %c0_i32_2 = arith.constant 0 : i32
    return %c0_i32, %c0_i32_0, %c0_i32_1 : i32, i32, i32
  }
  func.func @transform_3(%arg0: i32) -> (i32, i32, i32) {
    %c0_i32 = arith.constant 0 : i32
    %c0_i32_0 = arith.constant 0 : i32
    %c0_i32_1 = arith.constant 0 : i32
    %c0_i32_2 = arith.constant 0 : i32
    return %c0_i32, %c0_i32_0, %c0_i32_1 : i32, i32, i32
  }
  func.func @transform_4(%arg0: i32) -> (i32, i32) {
    %c0_i32 = arith.constant 0 : i32
    %c0_i32_0 = arith.constant 0 : i32
    return %c0_i32, %arg0 : i32, i32
  }
}

</mosaic_0001>

<llo_original>
// kernel: pinn_forward.1
$region0: #{pinn_forward.1}
  #allocation0 [shape = 'u32[]', space=smem, size = 0x4, offset = 0x4, fixed_abs, tag = 'smem constant byte address 0x4 - core index']
  #allocation1 [shape = 'u32[144,128]{1,0:T(1,128)}', space=vmem, size = 0x12000, scoped, tag = 'internal scratch']
  %s0 = inlined_call_operand.vmem [shape: f32[1,128], index: 0, kind: input, shape index: {}]
  %s1 = inlined_call_operand.vmem [shape: f32[1,128], index: 1, kind: input, shape index: {}]
  %s2 = inlined_call_operand.vmem [shape: f32[4,16,16], index: 2, kind: input, shape index: {}]
  %s3 = inlined_call_operand.vmem [shape: f32[4,16,1], index: 3, kind: input, shape index: {}]
  %s4 = inlined_call_operand.vmem [shape: f32[1,128], index: 4, kind: output, shape index: {}]
  %s5 = sld [smem:[#allocation0]]
  $region26: #{pinn_forward.1} parent=0
    _
  %s7 = ssub.s32 1, %s5
  %s8 = scalar_select 0, %s7, %s5
  // Predicated region
  $region2: #{pinn_forward.1} parent=0 // pred_check
    _
  $region3: #{pinn_forward.1} parent=0 // pred_check_branch
    %10 = sbr.rel (0) target = $region5
  $region4: #{pinn_forward.1} parent=0 // pred_region
    _
  $region5: #{pinn_forward.1} parent=0 // pred_fallthru
    _
  // Predicated region
  $region6: #{pinn_forward.1} parent=0 // pred_check
    _
  $region7: #{pinn_forward.1} parent=0 // pred_check_branch
    %12 = sbr.rel (0) target = $region9
  $region8: #{pinn_forward.1} parent=0 // pred_region
    _
  $region9: #{pinn_forward.1} parent=0 // pred_fallthru
    _
  // Predicated region
  $region10: #{pinn_forward.1} parent=0 // pred_check
    _
  $region11: #{pinn_forward.1} parent=0 // pred_check_branch
    %14 = sbr.rel (0) target = $region13
  $region12: #{pinn_forward.1} parent=0 // pred_region
    _
  $region13: #{pinn_forward.1} parent=0 // pred_fallthru
    _
  // Predicated region
  $region14: #{pinn_forward.1} parent=0 // pred_check
    _
  $region15: #{pinn_forward.1} parent=0 // pred_check_branch
    %16 = sbr.rel (0) target = $region17
  $region16: #{pinn_forward.1} parent=0 // pred_region
    _
  $region17: #{pinn_forward.1} parent=0 // pred_fallthru
    _
  %v17 = vld [vmem:[%s0] sm:$0x1]
  %v18 = vld [vmem:[%s1] sm:$0x1]
  %v19 = vld [vmem:[%s2] sm:$0xff]
  %v20 = vld [vmem:[%s2 + $0x8] sm:$0xff]
  %22 = vset.pattern.permute.xlu0 0
  %23 = vperm.xlu0 %22, %v19
  %v24 = vpop.permute.xlu0 %23
  %27 = vset.pattern.permute.xlu0 0
  %28 = vperm.xlu0 %27, %v20
  %v29 = vpop.permute.xlu0 %28
  %v32 = vlaneseq
  %v33 = vshrl.u32 %v32, 7
  %v34 = vsub.s32 0, %v33
  %v35 = vrot.slane %v17, %v34
  %v37 = vmul.f32 %v24, %v35
  %v38 = vmul.f32 %v29, %v35
  %39 = vset.pattern.permute.xlu0 1
  %40 = vperm.xlu0 %39, %v19
  %v41 = vpop.permute.xlu0 %40
  %43 = vset.pattern.permute.xlu0 1
  %44 = vperm.xlu0 %43, %v20
  %v45 = vpop.permute.xlu0 %44
  %v48 = vlaneseq
  %v49 = vshrl.u32 %v48, 7
  %v50 = vsub.s32 0, %v49
  %v51 = vrot.slane %v18, %v50
  %v53 = vmul.f32 %v41, %v51
  %v54 = vmul.f32 %v45, %v51
  %v55 = vadd.f32 %v37, %v53
  %v56 = vadd.f32 %v38, %v54
  %v57 = vld [vmem:[%s3] sm:$0xff]
  %v58 = vld [vmem:[%s3 + $0x8] sm:$0xff]
  %60 = vset.pattern.permute.xlu0 0
  %61 = vperm.xlu0 %60, %v57
  %v62 = vpop.permute.xlu0 %61
  %65 = vset.pattern.permute.xlu0 0
  %66 = vperm.xlu0 %65, %v58
  %v67 = vpop.permute.xlu0 %66
  %v69 = vadd.f32 %v55, %v62
  %v70 = vadd.f32 %v56, %v67
  %v71 = vtanh.pop %v69
  %v72 = vtanh.pop %v70
  %s73 = scalar_lea.vmem %s2, 16
  %v74 = vld [vmem:[%s73] sm:$0xff]
  %v75 = vld [vmem:[%s73 + $0x8] sm:$0xff]
  %s76 = scalar_lea.vmem %s3, 16
  %v77 = vld [vmem:[%s76] sm:$0xff]
  %v78 = vld [vmem:[%s76 + $0x8] sm:$0xff]
  %80 = vset.pattern.permute.xlu0 0
  %81 = vperm.xlu0 %80, %v77
  %v82 = vpop.permute.xlu0 %81
  %85 = vset.pattern.permute.xlu0 0
  %86 = vperm.xlu0 %85, %v78
  %v87 = vpop.permute.xlu0 %86
  %vm89 = vcmask 130048
  %v91 = vsel %vm89, %v74, 0
  %v94 = vsel %vm89, %v75, 0
  %96 = vmatprep.subr.mxu0 0.0
  %v97 = vand.u32 %v71, 4294901760
  %98 = vmatpush1.msra.mxu0 %v97
  %99 = vmatprep.subr.mxu0 0.0
  %v100 = vand.u32 %v72, 4294901760
  %101 = vmatpush1.msra.mxu0 %v100
  %102 = vmatprep.subr.mxu0 0.0
  %103 = vmatpush1.msra.mxu0 0.0
  %104 = vmatprep.subr.mxu0 0.0
  %105 = vmatpush1.msra.mxu0 0.0
  %106 = vmatprep.subr.mxu0 0.0
  %107 = vmatpush1.msra.mxu0 0.0
  %108 = vmatprep.subr.mxu0 0.0
  %109 = vmatpush1.msra.mxu0 0.0
  %110 = vmatprep.subr.mxu0 0.0
  %111 = vmatpush1.msra.mxu0 0.0
  %112 = vmatprep.subr.mxu0 0.0
  %113 = vmatpush1.msra.mxu0 0.0
  %114 = vmatprep.subr.mxu0 0.0
  %115 = vmatpush1.msra.mxu0 0.0
  %116 = vmatprep.subr.mxu0 0.0
  %117 = vmatpush1.msra.mxu0 0.0
  %118 = vmatprep.subr.mxu0 0.0
  %119 = vmatpush1.msra.mxu0 0.0
  %120 = vmatprep.subr.mxu0 0.0
  %121 = vmatpush1.msra.mxu0 0.0
  %122 = vmatprep.subr.mxu0 0.0
  %123 = vmatpush1.msra.mxu0 0.0
  %124 = vmatprep.subr.mxu0 0.0
  %125 = vmatpush1.msra.mxu0 0.0
  %126 = vmatprep.subr.mxu0 0.0
  %127 = vmatpush1.msra.mxu0 0.0
  %128 = vmatprep.subr.mxu0 0.0
  %129 = vmatpush1.msra.mxu0 0.0
  %130 = vmatprep.subr.mxu0 0.0
  %131 = vmatpush1.msra.mxu0 0.0
  %132 = vmatprep.subr.mxu0 0.0
  %133 = vmatpush1.msra.mxu0 0.0
  %134 = vmatprep.subr.mxu0 0.0
  %135 = vmatpush1.msra.mxu0 0.0
  %136 = vmatprep.subr.mxu0 0.0
  %137 = vmatpush1.msra.mxu0 0.0
  %138 = vmatprep.subr.mxu0 0.0
  %139 = vmatpush1.msra.mxu0 0.0
  %140 = vmatprep.subr.mxu0 0.0
  %141 = vmatpush1.msra.mxu0 0.0
  %142 = vmatprep.subr.mxu0 0.0
  %143 = vmatpush1.msra.mxu0 0.0
  %144 = vmatprep.subr.mxu0 0.0
  %145 = vmatpush1.msra.mxu0 0.0
  %146 = vmatprep.subr.mxu0 0.0
  %147 = vmatpush1.msra.mxu0 0.0
  %148 = vmatprep.subr.mxu0 0.0
  %149 = vmatpush1.msra.mxu0 0.0
  %150 = vmatprep.subr.mxu0 0.0
  %151 = vmatpush1.msra.mxu0 0.0
  %152 = vmatprep.subr.mxu0 0.0
  %153 = vmatpush1.msra.mxu0 0.0
  %154 = vmatprep.subr.mxu0 0.0
  %155 = vmatpush1.msra.mxu0 0.0
  %156 = vmatprep.subr.mxu0 0.0
  %157 = vmatpush1.msra.mxu0 0.0
  %158 = vmatprep.subr.mxu0 0.0
  %159 = vmatpush1.msra.mxu0 0.0
  %160 = vmatprep.subr.mxu0 0.0
  %161 = vmatpush1.msra.mxu0 0.0
  %162 = vmatprep.mubr.f32.mxu0 0.0
  %v163 = vand.u32 %v91, 4294901760
  %v164 = vsub.f32 %v91, %v163
  %v165 = vand.u32 %v164, 4294901760
  %v166 = vsub.f32 %v164, %v165
  %v167 = vand.u32 %v166, 4294901760
  %168 = vmatmul.mubr.f32.gmra.mrb[0].mxu0 %v167
  %v169 = vpop.f32.mrb[0].mxu0
  %v170 = vadd.f32 %v82, %v169
  %v171 = vpop.f32.mrb[0].mxu0
  %172 = vmatprep.mubr.f32.mxu0 0.0
  %v173 = vand.u32 %v94, 4294901760
  %v174 = vsub.f32 %v94, %v173
  %v175 = vand.u32 %v174, 4294901760
  %v176 = vsub.f32 %v174, %v175
  %v177 = vand.u32 %v176, 4294901760
  %178 = vmatmul.mubr.f32.gmra.mrb[0].mxu0 %v177
  %v179 = vpop.f32.mrb[0].mxu0
  %v180 = vadd.f32 %v87, %v179
  %v181 = vpop.f32.mrb[0].mxu0
  %182 = vdwg.mxu0
  %183 = vmatprep.subr.mxu0 0.0
  %v184 = vand.u32 %v71, 4294901760
  %v185 = vsub.f32 %v71, %v184
  %v186 = vand.u32 %v185, 4294901760
  %v187 = vsub.f32 %v185, %v186
  %v188 = vand.u32 %v187, 4294901760
  %189 = vmatpush1.msra.mxu0 %v188
  %190 = vmatprep.subr.mxu0 0.0
  %v191 = vand.u32 %v72, 4294901760
  %v192 = vsub.f32 %v72, %v191
  %v193 = vand.u32 %v192, 4294901760
  %v194 = vsub.f32 %v192, %v193
  %v195 = vand.u32 %v194, 4294901760
  %196 = vmatpush1.msra.mxu0 %v195
  %197 = vmatprep.subr.mxu0 0.0
  %198 = vmatpush1.msra.mxu0 0.0
  %199 = vmatprep.subr.mxu0 0.0
  %200 = vmatpush1.msra.mxu0 0.0
  %201 = vmatprep.subr.mxu0 0.0
  %202 = vmatpush1.msra.mxu0 0.0
  %203 = vmatprep.subr.mxu0 0.0
  %204 = vmatpush1.msra.mxu0 0.0
  %205 = vmatprep.subr.mxu0 0.0
  %206 = vmatpush1.msra.mxu0 0.0
  %207 = vmatprep.subr.mxu0 0.0
  %208 = vmatpush1.msra.mxu0 0.0
  %209 = vmatprep.subr.mxu0 0.0
  %210 = vmatpush1.msra.mxu0 0.0
  %211 = vmatprep.subr.mxu0 0.0
  %212 = vmatpush1.msra.mxu0 0.0
  %213 = vmatprep.subr.mxu0 0.0
  %214 = vmatpush1.msra.mxu0 0.0
  %215 = vmatprep.subr.mxu0 0.0
  %216 = vmatpush1.msra.mxu0 0.0
  %217 = vmatprep.subr.mxu0 0.0
  %218 = vmatpush1.msra.mxu0 0.0
  %219 = vmatprep.subr.mxu0 0.0
  %220 = vmatpush1.msra.mxu0 0.0
  %221 = vmatprep.subr.mxu0 0.0
  %222 = vmatpush1.msra.mxu0 0.0
  %223 = vmatprep.subr.mxu0 0.0
  %224 = vmatpush1.msra.mxu0 0.0
  %225 = vmatprep.subr.mxu0 0.0
  %226 = vmatpush1.msra.mxu0 0.0
  %227 = vmatprep.subr.mxu0 0.0
  %228 = vmatpush1.msra.mxu0 0.0
  %229 = vmatprep.subr.mxu0 0.0
  %230 = vmatpush1.msra.mxu0 0.0
  %231 = vmatprep.subr.mxu0 0.0
  %232 = vmatpush1.msra.mxu0 0.0
  %233 = vmatprep.subr.mxu0 0.0
  %234 = vmatpush1.msra.mxu0 0.0
  %235 = vmatprep.subr.mxu0 0.0
  %236 = vmatpush1.msra.mxu0 0.0
  %237 = vmatprep.subr.mxu0 0.0
  %238 = vmatpush1.msra.mxu0 0.0
  %239 = vmatprep.subr.mxu0 0.0
  %240 = vmatpush1.msra.mxu0 0.0
  %241 = vmatprep.subr.mxu0 0.0
  %242 = vmatpush1.msra.mxu0 0.0
  %243 = vmatprep.subr.mxu0 0.0
  %244 = vmatpush1.msra.mxu0 0.0
  %245 = vmatprep.subr.mxu0 0.0
  %246 = vmatpush1.msra.mxu0 0.0
  %247 = vmatprep.subr.mxu0 0.0
  %248 = vmatpush1.msra.mxu0 0.0
  %249 = vmatprep.subr.mxu0 0.0
  %250 = vmatpush1.msra.mxu0 0.0
  %251 = vmatprep.subr.mxu0 0.0
  %252 = vmatpush1.msra.mxu0 0.0
  %253 = vmatprep.subr.mxu0 0.0
  %254 = vmatpush1.msra.mxu0 0.0
  %255 = vmatprep.subr.mxu0 0.0
  %256 = vmatpush1.msra.mxu0 0.0
  %257 = vmatprep.mubr.f32.mxu0 0.0
  %v258 = vand.u32 %v91, 4294901760
  %259 = vmatmul.mubr.f32.gmra.mrb[0].mxu0 %v258
  %v260 = vpop.f32.mrb[0].mxu0
  %v261 = vadd.f32 %v170, %v260
  %v262 = vpop.f32.mrb[0].mxu0
  %263 = vmatprep.mubr.f32.mxu0 0.0
  %v264 = vand.u32 %v94, 4294901760
  %265 = vmatmul.mubr.f32.gmra.mrb[0].mxu0 %v264
  %v266 = vpop.f32.mrb[0].mxu0
  %v267 = vadd.f32 %v180, %v266
  %v268 = vpop.f32.mrb[0].mxu0
  %269 = vdwg.mxu0
  %270 = vmatprep.subr.mxu0 0.0
  %v271 = vand.u32 %v71, 4294901760
  %v272 = vsub.f32 %v71, %v271
  %273 = vmatpush1.msra.mxu0 %v272
  %274 = vmatprep.subr.mxu0 0.0
  %v275 = vand.u32 %v72, 4294901760
  %v276 = vsub.f32 %v72, %v275
  %277 = vmatpush1.msra.mxu0 %v276
  %278 = vmatprep.subr.mxu0 0.0
  %279 = vmatpush1.msra.mxu0 0.0
  %280 = vmatprep.subr.mxu0 0.0
  %281 = vmatpush1.msra.mxu0 0.0
  %282 = vmatprep.subr.mxu0 0.0
  %283 = vmatpush1.msra.mxu0 0.0
  %284 = vmatprep.subr.mxu0 0.0
  %285 = vmatpush1.msra.mxu0 0.0
  %286 = vmatprep.subr.mxu0 0.0
  %287 = vmatpush1.msra.mxu0 0.0
  %288 = vmatprep.subr.mxu0 0.0
  %289 = vmatpush1.msra.mxu0 0.0
  %290 = vmatprep.subr.mxu0 0.0
  %291 = vmatpush1.msra.mxu0 0.0
  %292 = vmatprep.subr.mxu0 0.0
  %293 = vmatpush1.msra.mxu0 0.0
  %294 = vmatprep.subr.mxu0 0.0
  %295 = vmatpush1.msra.mxu0 0.0
  %296 = vmatprep.subr.mxu0 0.0
  %297 = vmatpush1.msra.mxu0 0.0
  %298 = vmatprep.subr.mxu0 0.0
  %299 = vmatpush1.msra.mxu0 0.0
  %300 = vmatprep.subr.mxu0 0.0
  %301 = vmatpush1.msra.mxu0 0.0
  %302 = vmatprep.subr.mxu0 0.0
  %303 = vmatpush1.msra.mxu0 0.0
  %304 = vmatprep.subr.mxu0 0.0
  %305 = vmatpush1.msra.mxu0 0.0
  %306 = vmatprep.subr.mxu0 0.0
  %307 = vmatpush1.msra.mxu0 0.0
  %308 = vmatprep.subr.mxu0 0.0
  %309 = vmatpush1.msra.mxu0 0.0
  %310 = vmatprep.subr.mxu0 0.0
  %311 = vmatpush1.msra.mxu0 0.0
  %312 = vmatprep.subr.mxu0 0.0
  %313 = vmatpush1.msra.mxu0 0.0
  %314 = vmatprep.subr.mxu0 0.0
  %315 = vmatpush1.msra.mxu0 0.0
  %316 = vmatprep.subr.mxu0 0.0
  %317 = vmatpush1.msra.mxu0 0.0
  %318 = vmatprep.subr.mxu0 0.0
  %319 = vmatpush1.msra.mxu0 0.0
  %320 = vmatprep.subr.mxu0 0.0
  %321 = vmatpush1.msra.mxu0 0.0
  %322 = vmatprep.subr.mxu0 0.0
  %323 = vmatpush1.msra.mxu0 0.0
  %324 = vmatprep.subr.mxu0 0.0
  %325 = vmatpush1.msra.mxu0 0.0
  %326 = vmatprep.subr.mxu0 0.0
  %327 = vmatpush1.msra.mxu0 0.0
  %328 = vmatprep.subr.mxu0 0.0
  %329 = vmatpush1.msra.mxu0 0.0
  %330 = vmatprep.subr.mxu0 0.0
  %331 = vmatpush1.msra.mxu0 0.0
  %332 = vmatprep.subr.mxu0 0.0
  %333 = vmatpush1.msra.mxu0 0.0
  %334 = vmatprep.subr.mxu0 0.0
  %335 = vmatpush1.msra.mxu0 0.0
  %336 = vmatprep.subr.mxu0 0.0
  %337 = vmatpush1.msra.mxu0 0.0
  %338 = vmatprep.mubr.f32.mxu0 0.0
  %v339 = vand.u32 %v91, 4294901760
  %v340 = vsub.f32 %v91, %v339
  %341 = vmatmul.mubr.f32.gmra.mrb[0].mxu0 %v340
  %v342 = vpop.f32.mrb[0].mxu0
  %v343 = vadd.f32 %v261, %v342
  %v344 = vpop.f32.mrb[0].mxu0
  %345 = vmatprep.mubr.f32.mxu0 0.0
  %v346 = vand.u32 %v94, 4294901760
  %v347 = vsub.f32 %v94, %v346
  %348 = vmatmul.mubr.f32.gmra.mrb[0].mxu0 %v347
  %v349 = vpop.f32.mrb[0].mxu0
  %v350 = vadd.f32 %v267, %v349
  %v351 = vpop.f32.mrb[0].mxu0
  %352 = vdwg.mxu0
  %353 = vmatprep.subr.mxu0 0.0
  %v354 = vand.u32 %v71, 4294901760
  %355 = vmatpush1.msra.mxu0 %v354
  %356 = vmatprep.subr.mxu0 0.0
  %v357 = vand.u32 %v72, 4294901760
  %358 = vmatpush1.msra.mxu0 %v357
  %359 = vmatprep.subr.mxu0 0.0
  %360 = vmatpush1.msra.mxu0 0.0
  %361 = vmatprep.subr.mxu0 0.0
  %362 = vmatpush1.msra.mxu0 0.0
  %363 = vmatprep.subr.mxu0 0.0
  %364 = vmatpush1.msra.mxu0 0.0
  %365 = vmatprep.subr.mxu0 0.0
  %366 = vmatpush1.msra.mxu0 0.0
  %367 = vmatprep.subr.mxu0 0.0
  %368 = vmatpush1.msra.mxu0 0.0
  %369 = vmatprep.subr.mxu0 0.0
  %370 = vmatpush1.msra.mxu0 0.0
  %371 = vmatprep.subr.mxu0 0.0
  %372 = vmatpush1.msra.mxu0 0.0
  %373 = vmatprep.subr.mxu0 0.0
  %374 = vmatpush1.msra.mxu0 0.0
  %375 = vmatprep.subr.mxu0 0.0
  %376 = vmatpush1.msra.mxu0 0.0
  %377 = vmatprep.subr.mxu0 0.0
  %378 = vmatpush1.msra.mxu0 0.0
  %379 = vmatprep.subr.mxu0 0.0
  %380 = vmatpush1.msra.mxu0 0.0
  %381 = vmatprep.subr.mxu0 0.0
  %382 = vmatpush1.msra.mxu0 0.0
  %383 = vmatprep.subr.mxu0 0.0
  %384 = vmatpush1.msra.mxu0 0.0
  %385 = vmatprep.subr.mxu0 0.0
  %386 = vmatpush1.msra.mxu0 0.0
  %387 = vmatprep.subr.mxu0 0.0
  %388 = vmatpush1.msra.mxu0 0.0
  %389 = vmatprep.subr.mxu0 0.0
  %390 = vmatpush1.msra.mxu0 0.0
  %391 = vmatprep.subr.mxu0 0.0
  %392 = vmatpush1.msra.mxu0 0.0
  %393 = vmatprep.subr.mxu0 0.0
  %394 = vmatpush1.msra.mxu0 0.0
  %395 = vmatprep.subr.mxu0 0.0
  %396 = vmatpush1.msra.mxu0 0.0
  %397 = vmatprep.subr.mxu0 0.0
  %398 = vmatpush1.msra.mxu0 0.0
  %399 = vmatprep.subr.mxu0 0.0
  %400 = vmatpush1.msra.mxu0 0.0
  %401 = vmatprep.subr.mxu0 0.0
  %402 = vmatpush1.msra.mxu0 0.0
  %403 = vmatprep.subr.mxu0 0.0
  %404 = vmatpush1.msra.mxu0 0.0
  %405 = vmatprep.subr.mxu0 0.0
  %406 = vmatpush1.msra.mxu0 0.0
  %407 = vmatprep.subr.mxu0 0.0
  %408 = vmatpush1.msra.mxu0 0.0
  %409 = vmatprep.subr.mxu0 0.0
  %410 = vmatpush1.msra.mxu0 0.0
  %411 = vmatprep.subr.mxu0 0.0
  %412 = vmatpush1.msra.mxu0 0.0
  %413 = vmatprep.subr.mxu0 0.0
  %414 = vmatpush1.msra.mxu0 0.0
  %415 = vmatprep.subr.mxu0 0.0
  %416 = vmatpush1.msra.mxu0 0.0
  %417 = vmatprep.subr.mxu0 0.0
  %418 = vmatpush1.msra.mxu0 0.0
  %419 = vmatprep.mubr.f32.mxu0 0.0
  %v420 = vand.u32 %v91, 4294901760
  %v421 = vsub.f32 %v91, %v420
  %v422 = vand.u32 %v421, 4294901760
  %423 = vmatmul.mubr.f32.gmra.mrb[0].mxu0 %v422
  %v424 = vpop.f32.mrb[0].mxu0
  %v425 = vadd.f32 %v343, %v424
  %v426 = vpop.f32.mrb[0].mxu0
  %427 = vmatprep.mubr.f32.mxu0 0.0
  %v428 = vand.u32 %v94, 4294901760
  %v429 = vsub.f32 %v94, %v428
  %v430 = vand.u32 %v429, 4294901760
  %431 = vmatmul.mubr.f32.gmra.mrb[0].mxu0 %v430
  %v432 = vpop.f32.mrb[0].mxu0
  %v433 = vadd.f32 %v350, %v432
  %v434 = vpop.f32.mrb[0].mxu0
  %435 = vdwg.mxu0
  %436 = vmatprep.subr.mxu0 0.0
  %v437 = vand.u32 %v71, 4294901760
  %v438 = vsub.f32 %v71, %v437
  %v439 = vand.u32 %v438, 4294901760
  %440 = vmatpush1.msra.mxu0 %v439
  %441 = vmatprep.subr.mxu0 0.0
  %v442 = vand.u32 %v72, 4294901760
  %v443 = vsub.f32 %v72, %v442
  %v444 = vand.u32 %v443, 4294901760
  %445 = vmatpush1.msra.mxu0 %v444
  %446 = vmatprep.subr.mxu0 0.0
  %447 = vmatpush1.msra.mxu0 0.0
  %448 = vmatprep.subr.mxu0 0.0
  %449 = vmatpush1.msra.mxu0 0.0
  %450 = vmatprep.subr.mxu0 0.0
  %451 = vmatpush1.msra.mxu0 0.0
  %452 = vmatprep.subr.mxu0 0.0
  %453 = vmatpush1.msra.mxu0 0.0
  %454 = vmatprep.subr.mxu0 0.0
  %455 = vmatpush1.msra.mxu0 0.0
  %456 = vmatprep.subr.mxu0 0.0
  %457 = vmatpush1.msra.mxu0 0.0
  %458 = vmatprep.subr.mxu0 0.0
  %459 = vmatpush1.msra.mxu0 0.0
  %460 = vmatprep.subr.mxu0 0.0
  %461 = vmatpush1.msra.mxu0 0.0
  %462 = vmatprep.subr.mxu0 0.0
  %463 = vmatpush1.msra.mxu0 0.0
  %464 = vmatprep.subr.mxu0 0.0
  %465 = vmatpush1.msra.mxu0 0.0
  %466 = vmatprep.subr.mxu0 0.0
  %467 = vmatpush1.msra.mxu0 0.0
  %468 = vmatprep.subr.mxu0 0.0
  %469 = vmatpush1.msra.mxu0 0.0
  %470 = vmatprep.subr.mxu0 0.0
  %471 = vmatpush1.msra.mxu0 0.0
  %472 = vmatprep.subr.mxu0 0.0
  %473 = vmatpush1.msra.mxu0 0.0
  %474 = vmatprep.subr.mxu0 0.0
  %475 = vmatpush1.msra.mxu0 0.0
  %476 = vmatprep.subr.mxu0 0.0
  %477 = vmatpush1.msra.mxu0 0.0
  %478 = vmatprep.subr.mxu0 0.0
  %479 = vmatpush1.msra.mxu0 0.0
  %480 = vmatprep.subr.mxu0 0.0
  %481 = vmatpush1.msra.mxu0 0.0
  %482 = vmatprep.subr.mxu0 0.0
  %483 = vmatpush1.msra.mxu0 0.0
  %484 = vmatprep.subr.mxu0 0.0
  %485 = vmatpush1.msra.mxu0 0.0
  %486 = vmatprep.subr.mxu0 0.0
  %487 = vmatpush1.msra.mxu0 0.0
  %488 = vmatprep.subr.mxu0 0.0
  %489 = vmatpush1.msra.mxu0 0.0
  %490 = vmatprep.subr.mxu0 0.0
  %491 = vmatpush1.msra.mxu0 0.0
  %492 = vmatprep.subr.mxu0 0.0
  %493 = vmatpush1.msra.mxu0 0.0
  %494 = vmatprep.subr.mxu0 0.0
  %495 = vmatpush1.msra.mxu0 0.0
  %496 = vmatprep.subr.mxu0 0.0
  %497 = vmatpush1.msra.mxu0 0.0
  %498 = vmatprep.subr.mxu0 0.0
  %499 = vmatpush1.msra.mxu0 0.0
  %500 = vmatprep.subr.mxu0 0.0
  %501 = vmatpush1.msra.mxu0 0.0
  %502 = vmatprep.subr.mxu0 0.0
  %503 = vmatpush1.msra.mxu0 0.0
  %504 = vmatprep.subr.mxu0 0.0
  %505 = vmatpush1.msra.mxu0 0.0
  %506 = vmatprep.mubr.f32.mxu0 0.0
  %v507 = vand.u32 %v91, 4294901760
  %508 = vmatmul.mubr.f32.gmra.mrb[0].mxu0 %v507
  %v509 = vpop.f32.mrb[0].mxu0
  %v510 = vadd.f32 %v425, %v509
  %v511 = vpop.f32.mrb[0].mxu0
  %512 = vmatprep.mubr.f32.mxu0 0.0
  %v513 = vand.u32 %v94, 4294901760
  %514 = vmatmul.mubr.f32.gmra.mrb[0].mxu0 %v513
  %v515 = vpop.f32.mrb[0].mxu0
  %v516 = vadd.f32 %v433, %v515
  %v517 = vpop.f32.mrb[0].mxu0
  %518 = vdwg.mxu0
  %519 = vmatprep.subr.mxu0 0.0
  %v520 = vand.u32 %v71, 4294901760
  %521 = vmatpush1.msra.mxu0 %v520
  %522 = vmatprep.subr.mxu0 0.0
  %v523 = vand.u32 %v72, 4294901760
  %524 = vmatpush1.msra.mxu0 %v523
  %525 = vmatprep.subr.mxu0 0.0
  %526 = vmatpush1.msra.mxu0 0.0
  %527 = vmatprep.subr.mxu0 0.0
  %528 = vmatpush1.msra.mxu0 0.0
  %529 = vmatprep.subr.mxu0 0.0
  %530 = vmatpush1.msra.mxu0 0.0
  %531 = vmatprep.subr.mxu0 0.0
  %532 = vmatpush1.msra.mxu0 0.0
  %533 = vmatprep.subr.mxu0 0.0
  %534 = vmatpush1.msra.mxu0 0.0
  %535 = vmatprep.subr.mxu0 0.0
  %536 = vmatpush1.msra.mxu0 0.0
  %537 = vmatprep.subr.mxu0 0.0
  %538 = vmatpush1.msra.mxu0 0.0
  %539 = vmatprep.subr.mxu0 0.0
  %540 = vmatpush1.msra.mxu0 0.0
  %541 = vmatprep.subr.mxu0 0.0
  %542 = vmatpush1.msra.mxu0 0.0
  %543 = vmatprep.subr.mxu0 0.0
  %544 = vmatpush1.msra.mxu0 0.0
  %545 = vmatprep.subr.mxu0 0.0
  %546 = vmatpush1.msra.mxu0 0.0
  %547 = vmatprep.subr.mxu0 0.0
  %548 = vmatpush1.msra.mxu0 0.0
  %549 = vmatprep.subr.mxu0 0.0
  %550 = vmatpush1.msra.mxu0 0.0
  %551 = vmatprep.subr.mxu0 0.0
  %552 = vmatpush1.msra.mxu0 0.0
  %553 = vmatprep.subr.mxu0 0.0
  %554 = vmatpush1.msra.mxu0 0.0
  %555 = vmatprep.subr.mxu0 0.0
  %556 = vmatpush1.msra.mxu0 0.0
  %557 = vmatprep.subr.mxu0 0.0
  %558 = vmatpush1.msra.mxu0 0.0
  %559 = vmatprep.subr.mxu0 0.0
  %560 = vmatpush1.msra.mxu0 0.0
  %561 = vmatprep.subr.mxu0 0.0
  %562 = vmatpush1.msra.mxu0 0.0
  %563 = vmatprep.subr.mxu0 0.0
  %564 = vmatpush1.msra.mxu0 0.0
  %565 = vmatprep.subr.mxu0 0.0
  %566 = vmatpush1.msra.mxu0 0.0
  %567 = vmatprep.subr.mxu0 0.0
  %568 = vmatpush1.msra.mxu0 0.0
  %569 = vmatprep.subr.mxu0 0.0
  %570 = vmatpush1.msra.mxu0 0.0
  %571 = vmatprep.subr.mxu0 0.0
  %572 = vmatpush1.msra.mxu0 0.0
  %573 = vmatprep.subr.mxu0 0.0
  %574 = vmatpush1.msra.mxu0 0.0
  %575 = vmatprep.subr.mxu0 0.0
  %576 = vmatpush1.msra.mxu0 0.0
  %577 = vmatprep.subr.mxu0 0.0
  %578 = vmatpush1.msra.mxu0 0.0
  %579 = vmatprep.subr.mxu0 0.0
  %580 = vmatpush1.msra.mxu0 0.0
  %581 = vmatprep.subr.mxu0 0.0
  %582 = vmatpush1.msra.mxu0 0.0
  %583 = vmatprep.subr.mxu0 0.0
  %584 = vmatpush1.msra.mxu0 0.0
  %585 = vmatprep.mubr.f32.mxu0 0.0
  %v586 = vand.u32 %v91, 4294901760
  %587 = vmatmul.mubr.f32.gmra.mrb[0].mxu0 %v586
  %v588 = vpop.f32.mrb[0].mxu0
  %v589 = vadd.f32 %v510, %v588
  %v590 = vpop.f32.mrb[0].mxu0
  %591 = vmatprep.mubr.f32.mxu0 0.0
  %v592 = vand.u32 %v94, 4294901760
  %593 = vmatmul.mubr.f32.gmra.mrb[0].mxu0 %v592
  %v594 = vpop.f32.mrb[0].mxu0
  %v595 = vadd.f32 %v516, %v594
  %v596 = vpop.f32.mrb[0].mxu0
  %597 = vdwg.mxu0
  %v598 = vtanh.pop %v589
  %v599 = vtanh.pop %v595
  %s600 = scalar_lea.vmem %s2, 32
  %v601 = vld [vmem:[%s600] sm:$0xff]
  %v602 = vld [vmem:[%s600 + $0x8] sm:$0xff]
  %s603 = scalar_lea.vmem %s3, 32
  %v604 = vld [vmem:[%s603] sm:$0xff]
  %v605 = vld [vmem:[%s603 + $0x8] sm:$0xff]
  %607 = vset.pattern.permute.xlu0 0
  %608 = vperm.xlu0 %607, %v604
  %v609 = vpop.permute.xlu0 %608
  %612 = vset.pattern.permute.xlu0 0
  %613 = vperm.xlu0 %612, %v605
  %v614 = vpop.permute.xlu0 %613
  %v617 = vsel %vm89, %v601, 0
  %v620 = vsel %vm89, %v602, 0
  %622 = vmatprep.subr.mxu0 0.0
  %v623 = vand.u32 %v598, 4294901760
  %624 = vmatpush1.msra.mxu0 %v623
  %625 = vmatprep.subr.mxu0 0.0
  %v626 = vand.u32 %v599, 4294901760
  %627 = vmatpush1.msra.mxu0 %v626
  %628 = vmatprep.subr.mxu0 0.0
  %629 = vmatpush1.msra.mxu0 0.0
  %630 = vmatprep.subr.mxu0 0.0
  %631 = vmatpush1.msra.mxu0 0.0
  %632 = vmatprep.subr.mxu0 0.0
  %633 = vmatpush1.msra.mxu0 0.0
  %634 = vmatprep.subr.mxu0 0.0
  %635 = vmatpush1.msra.mxu0 0.0
  %636 = vmatprep.subr.mxu0 0.0
  %637 = vmatpush1.msra.mxu0 0.0
  %638 = vmatprep.subr.mxu0 0.0
  %639 = vmatpush1.msra.mxu0 0.0
  %640 = vmatprep.subr.mxu0 0.0
  %641 = vmatpush1.msra.mxu0 0.0
  %642 = vmatprep.subr.mxu0 0.0
  %643 = vmatpush1.msra.mxu0 0.0
  %644 = vmatprep.subr.mxu0 0.0
  %645 = vmatpush1.msra.mxu0 0.0
  %646 = vmatprep.subr.mxu0 0.0
  %647 = vmatpush1.msra.mxu0 0.0
  %648 = vmatprep.subr.mxu0 0.0
  %649 = vmatpush1.msra.mxu0 0.0
  %650 = vmatprep.subr.mxu0 0.0
  %651 = vmatpush1.msra.mxu0 0.0
  %652 = vmatprep.subr.mxu0 0.0
  %653 = vmatpush1.msra.mxu0 0.0
  %654 = vmatprep.subr.mxu0 0.0
  %655 = vmatpush1.msra.mxu0 0.0
  %656 = vmatprep.subr.mxu0 0.0
  %657 = vmatpush1.msra.mxu0 0.0
  %658 = vmatprep.subr.mxu0 0.0
  %659 = vmatpush1.msra.mxu0 0.0
  %660 = vmatprep.subr.mxu0 0.0
  %661 = vmatpush1.msra.mxu0 0.0
  %662 = vmatprep.subr.mxu0 0.0
  %663 = vmatpush1.msra.mxu0 0.0
  %664 = vmatprep.subr.mxu0 0.0
  %665 = vmatpush1.msra.mxu0 0.0
  %666 = vmatprep.subr.mxu0 0.0
  %667 = vmatpush1.msra.mxu0 0.0
  %668 = vmatprep.subr.mxu0 0.0
  %669 = vmatpush1.msra.mxu0 0.0
  %670 = vmatprep.subr.mxu0 0.0
  %671 = vmatpush1.msra.mxu0 0.0
  %672 = vmatprep.subr.mxu0 0.0
  %673 = vmatpush1.msra.mxu0 0.0
  %674 = vmatprep.subr.mxu0 0.0
  %675 = vmatpush1.msra.mxu0 0.0
  %676 = vmatprep.subr.mxu0 0.0
  %677 = vmatpush1.msra.mxu0 0.0
  %678 = vmatprep.subr.mxu0 0.0
  %679 = vmatpush1.msra.mxu0 0.0
  %680 = vmatprep.subr.mxu0 0.0
  %681 = vmatpush1.msra.mxu0 0.0
  %682 = vmatprep.subr.mxu0 0.0
  %683 = vmatpush1.msra.mxu0 0.0
  %684 = vmatprep.subr.mxu0 0.0
  %685 = vmatpush1.msra.mxu0 0.0
  %686 = vmatprep.subr.mxu0 0.0
  %687 = vmatpush1.msra.mxu0 0.0
  %688 = vmatprep.mubr.f32.mxu0 0.0
  %v689 = vand.u32 %v617, 4294901760
  %v690 = vsub.f32 %v617, %v689
  %v691 = vand.u32 %v690, 4294901760
  %v692 = vsub.f32 %v690, %v691
  %v693 = vand.u32 %v692, 4294901760
  %694 = vmatmul.mubr.f32.gmra.mrb[0].mxu0 %v693
  %v695 = vpop.f32.mrb[0].mxu0
  %v696 = vadd.f32 %v609, %v695
  %v697 = vpop.f32.mrb[0].mxu0
  %698 = vmatprep.mubr.f32.mxu0 0.0
  %v699 = vand.u32 %v620, 4294901760
  %v700 = vsub.f32 %v620, %v699
  %v701 = vand.u32 %v700, 4294901760
  %v702 = vsub.f32 %v700, %v701
  %v703 = vand.u32 %v702, 4294901760
  %704 = vmatmul.mubr.f32.gmra.mrb[0].mxu0 %v703
  %v705 = vpop.f32.mrb[0].mxu0
  %v706 = vadd.f32 %v614, %v705
  %v707 = vpop.f32.mrb[0].mxu0
  %708 = vdwg.mxu0
  %709 = vmatprep.subr.mxu0 0.0
  %v710 = vand.u32 %v598, 4294901760
  %v711 = vsub.f32 %v598, %v710
  %v712 = vand.u32 %v711, 4294901760
  %v713 = vsub.f32 %v711, %v712
  %v714 = vand.u32 %v713, 4294901760
  %715 = vmatpush1.msra.mxu0 %v714
  %716 = vmatprep.subr.mxu0 0.0
  %v717 = vand.u32 %v599, 4294901760
  %v718 = vsub.f32 %v599, %v717
  %v719 = vand.u32 %v718, 4294901760
  %v720 = vsub.f32 %v718, %v719
  %v721 = vand.u32 %v720, 4294901760
  %722 = vmatpush1.msra.mxu0 %v721
  %723 = vmatprep.subr.mxu0 0.0
  %724 = vmatpush1.msra.mxu0 0.0
  %725 = vmatprep.subr.mxu0 0.0
  %726 = vmatpush1.msra.mxu0 0.0
  %727 = vmatprep.subr.mxu0 0.0
  %728 = vmatpush1.msra.mxu0 0.0
  %729 = vmatprep.subr.mxu0 0.0
  %730 = vmatpush1.msra.mxu0 0.0
  %731 = vmatprep.subr.mxu0 0.0
  %732 = vmatpush1.msra.mxu0 0.0
  %733 = vmatprep.subr.mxu0 0.0
  %734 = vmatpush1.msra.mxu0 0.0
  %735 = vmatprep.subr.mxu0 0.0
  %736 = vmatpush1.msra.mxu0 0.0
  %737 = vmatprep.subr.mxu0 0.0
  %738 = vmatpush1.msra.mxu0 0.0
  %739 = vmatprep.subr.mxu0 0.0
  %740 = vmatpush1.msra.mxu0 0.0
  %741 = vmatprep.subr.mxu0 0.0
  %742 = vmatpush1.msra.mxu0 0.0
  %743 = vmatprep.subr.mxu0 0.0
  %744 = vmatpush1.msra.mxu0 0.0
  %745 = vmatprep.subr.mxu0 0.0
  %746 = vmatpush1.msra.mxu0 0.0
  %747 = vmatprep.subr.mxu0 0.0
  %748 = vmatpush1.msra.mxu0 0.0
  %749 = vmatprep.subr.mxu0 0.0
  %750 = vmatpush1.msra.mxu0 0.0
  %751 = vmatprep.subr.mxu0 0.0
  %752 = vmatpush1.msra.mxu0 0.0
  %753 = vmatprep.subr.mxu0 0.0
  %754 = vmatpush1.msra.mxu0 0.0
  %755 = vmatprep.subr.mxu0 0.0
  %756 = vmatpush1.msra.mxu0 0.0
  %757 = vmatprep.subr.mxu0 0.0
  %758 = vmatpush1.msra.mxu0 0.0
  %759 = vmatprep.subr.mxu0 0.0
  %760 = vmatpush1.msra.mxu0 0.0
  %761 = vmatprep.subr.mxu0 0.0
  %762 = vmatpush1.msra.mxu0 0.0
  %763 = vmatprep.subr.mxu0 0.0
  %764 = vmatpush1.msra.mxu0 0.0
  %765 = vmatprep.subr.mxu0 0.0
  %766 = vmatpush1.msra.mxu0 0.0
  %767 = vmatprep.subr.mxu0 0.0
  %768 = vmatpush1.msra.mxu0 0.0
  %769 = vmatprep.subr.mxu0 0.0
  %770 = vmatpush1.msra.mxu0 0.0
  %771 = vmatprep.subr.mxu0 0.0
  %772 = vmatpush1.msra.mxu0 0.0
  %773 = vmatprep.subr.mxu0 0.0
  %774 = vmatpush1.msra.mxu0 0.0
  %775 = vmatprep.subr.mxu0 0.0
  %776 = vmatpush1.msra.mxu0 0.0
  %777 = vmatprep.subr.mxu0 0.0
  %778 = vmatpush1.msra.mxu0 0.0
  %779 = vmatprep.subr.mxu0 0.0
  %780 = vmatpush1.msra.mxu0 0.0
  %781 = vmatprep.subr.mxu0 0.0
  %782 = vmatpush1.msra.mxu0 0.0
  %783 = vmatprep.mubr.f32.mxu0 0.0
  %v784 = vand.u32 %v617, 4294901760
  %785 = vmatmul.mubr.f32.gmra.mrb[0].mxu0 %v784
  %v786 = vpop.f32.mrb[0].mxu0
  %v787 = vadd.f32 %v696, %v786
  %v788 = vpop.f32.mrb[0].mxu0
  %789 = vmatprep.mubr.f32.mxu0 0.0
  %v790 = vand.u32 %v620, 4294901760
  %791 = vmatmul.mubr.f32.gmra.mrb[0].mxu0 %v790
  %v792 = vpop.f32.mrb[0].mxu0
  %v793 = vadd.f32 %v706, %v792
  %v794 = vpop.f32.mrb[0].mxu0
  %795 = vdwg.mxu0
  %796 = vmatprep.subr.mxu0 0.0
  %v797 = vand.u32 %v598, 4294901760
  %v798 = vsub.f32 %v598, %v797
  %799 = vmatpush1.msra.mxu0 %v798
  %800 = vmatprep.subr.mxu0 0.0
  %v801 = vand.u32 %v599, 4294901760
  %v802 = vsub.f32 %v599, %v801
  %803 = vmatpush1.msra.mxu0 %v802
  %804 = vmatprep.subr.mxu0 0.0
  %805 = vmatpush1.msra.mxu0 0.0
  %806 = vmatprep.subr.mxu0 0.0
  %807 = vmatpush1.msra.mxu0 0.0
  %808 = vmatprep.subr.mxu0 0.0
  %809 = vmatpush1.msra.mxu0 0.0
  %810 = vmatprep.subr.mxu0 0.0
  %811 = vmatpush1.msra.mxu0 0.0
  %812 = vmatprep.subr.mxu0 0.0
  %813 = vmatpush1.msra.mxu0 0.0
  %814 = vmatprep.subr.mxu0 0.0
  %815 = vmatpush1.msra.mxu0 0.0
  %816 = vmatprep.subr.mxu0 0.0
  %817 = vmatpush1.msra.mxu0 0.0
  %818 = vmatprep.subr.mxu0 0.0
  %819 = vmatpush1.msra.mxu0 0.0
  %820 = vmatprep.subr.mxu0 0.0
  %821 = vmatpush1.msra.mxu0 0.0
  %822 = vmatprep.subr.mxu0 0.0
  %823 = vmatpush1.msra.mxu0 0.0
  %824 = vmatprep.subr.mxu0 0.0
  %825 = vmatpush1.msra.mxu0 0.0
  %826 = vmatprep.subr.mxu0 0.0
  %827 = vmatpush1.msra.mxu0 0.0
  %828 = vmatprep.subr.mxu0 0.0
  %829 = vmatpush1.msra.mxu0 0.0
  %830 = vmatprep.subr.mxu0 0.0
  %831 = vmatpush1.msra.mxu0 0.0
  %832 = vmatprep.subr.mxu0 0.0
  %833 = vmatpush1.msra.mxu0 0.0
  %834 = vmatprep.subr.mxu0 0.0
  %835 = vmatpush1.msra.mxu0 0.0
  %836 = vmatprep.subr.mxu0 0.0
  %837 = vmatpush1.msra.mxu0 0.0
  %838 = vmatprep.subr.mxu0 0.0
  %839 = vmatpush1.msra.mxu0 0.0
  %840 = vmatprep.subr.mxu0 0.0
  %841 = vmatpush1.msra.mxu0 0.0
  %842 = vmatprep.subr.mxu0 0.0
  %843 = vmatpush1.msra.mxu0 0.0
  %844 = vmatprep.subr.mxu0 0.0
  %845 = vmatpush1.msra.mxu0 0.0
  %846 = vmatprep.subr.mxu0 0.0
  %847 = vmatpush1.msra.mxu0 0.0
  %848 = vmatprep.subr.mxu0 0.0
  %849 = vmatpush1.msra.mxu0 0.0
  %850 = vmatprep.subr.mxu0 0.0
  %851 = vmatpush1.msra.mxu0 0.0
  %852 = vmatprep.subr.mxu0 0.0
  %853 = vmatpush1.msra.mxu0 0.0
  %854 = vmatprep.subr.mxu0 0.0
  %855 = vmatpush1.msra.mxu0 0.0
  %856 = vmatprep.subr.mxu0 0.0
  %857 = vmatpush1.msra.mxu0 0.0
  %858 = vmatprep.subr.mxu0 0.0
  %859 = vmatpush1.msra.mxu0 0.0
  %860 = vmatprep.subr.mxu0 0.0
  %861 = vmatpush1.msra.mxu0 0.0
  %862 = vmatprep.subr.mxu0 0.0
  %863 = vmatpush1.msra.mxu0 0.0
  %864 = vmatprep.mubr.f32.mxu0 0.0
  %v865 = vand.u32 %v617, 4294901760
  %v866 = vsub.f32 %v617, %v865
  %867 = vmatmul.mubr.f32.gmra.mrb[0].mxu0 %v866
  %v868 = vpop.f32.mrb[0].mxu0
  %v869 = vadd.f32 %v787, %v868
  %v870 = vpop.f32.mrb[0].mxu0
  %871 = vmatprep.mubr.f32.mxu0 0.0
  %v872 = vand.u32 %v620, 4294901760
  %v873 = vsub.f32 %v620, %v872
  %874 = vmatmul.mubr.f32.gmra.mrb[0].mxu0 %v873
  %v875 = vpop.f32.mrb[0].mxu0
  %v876 = vadd.f32 %v793, %v875
  %v877 = vpop.f32.mrb[0].mxu0
  %878 = vdwg.mxu0
  %879 = vmatprep.subr.mxu0 0.0
  %v880 = vand.u32 %v598, 4294901760
  %881 = vmatpush1.msra.mxu0 %v880
  %882 = vmatprep.subr.mxu0 0.0
  %v883 = vand.u32 %v599, 4294901760
  %884 = vmatpush1.msra.mxu0 %v883
  %885 = vmatprep.subr.mxu0 0.0
  %886 = vmatpush1.msra.mxu0 0.0
  %887 = vmatprep.subr.mxu0 0.0
  %888 = vmatpush1.msra.mxu0 0.0
  %889 = vmatprep.subr.mxu0 0.0
  %890 = vmatpush1.msra.mxu0 0.0
  %891 = vmatprep.subr.mxu0 0.0
  %892 = vmatpush1.msra.mxu0 0.0
  %893 = vmatprep.subr.mxu0 0.0
  %894 = vmatpush1.msra.mxu0 0.0
  %895 = vmatprep.subr.mxu0 0.0
  %896 = vmatpush1.msra.mxu0 0.0
  %897 = vmatprep.subr.mxu0 0.0
  %898 = vmatpush1.msra.mxu0 0.0
  %899 = vmatprep.subr.mxu0 0.0
  %900 = vmatpush1.msra.mxu0 0.0
  %901 = vmatprep.subr.mxu0 0.0
  %902 = vmatpush1.msra.mxu0 0.0
  %903 = vmatprep.subr.mxu0 0.0
  %904 = vmatpush1.msra.mxu0 0.0
  %905 = vmatprep.subr.mxu0 0.0
  %906 = vmatpush1.msra.mxu0 0.0
  %907 = vmatprep.subr.mxu0 0.0
  %908 = vmatpush1.msra.mxu0 0.0
  %909 = vmatprep.subr.mxu0 0.0
  %910 = vmatpush1.msra.mxu0 0.0
  %911 = vmatprep.subr.mxu0 0.0
  %912 = vmatpush1.msra.mxu0 0.0
  %913 = vmatprep.subr.mxu0 0.0
  %914 = vmatpush1.msra.mxu0 0.0
  %915 = vmatprep.subr.mxu0 0.0
  %916 = vmatpush1.msra.mxu0 0.0
  %917 = vmatprep.subr.mxu0 0.0
  %918 = vmatpush1.msra.mxu0 0.0
  %919 = vmatprep.subr.mxu0 0.0
  %920 = vmatpush1.msra.mxu0 0.0
  %921 = vmatprep.subr.mxu0 0.0
  %922 = vmatpush1.msra.mxu0 0.0
  %923 = vmatprep.subr.mxu0 0.0
  %924 = vmatpush1.msra.mxu0 0.0
  %925 = vmatprep.subr.mxu0 0.0
  %926 = vmatpush1.msra.mxu0 0.0
  %927 = vmatprep.subr.mxu0 0.0
  %928 = vmatpush1.msra.mxu0 0.0
  %929 = vmatprep.subr.mxu0 0.0
  %930 = vmatpush1.msra.mxu0 0.0
  %931 = vmatprep.subr.mxu0 0.0
  %932 = vmatpush1.msra.mxu0 0.0
  %933 = vmatprep.subr.mxu0 0.0
  %934 = vmatpush1.msra.mxu0 0.0
  %935 = vmatprep.subr.mxu0 0.0
  %936 = vmatpush1.msra.mxu0 0.0
  %937 = vmatprep.subr.mxu0 0.0
  %938 = vmatpush1.msra.mxu0 0.0
  %939 = vmatprep.subr.mxu0 0.0
  %940 = vmatpush1.msra.mxu0 0.0
  %941 = vmatprep.subr.mxu0 0.0
  %942 = vmatpush1.msra.mxu0 0.0
  %943 = vmatprep.subr.mxu0 0.0
  %944 = vmatpush1.msra.mxu0 0.0
  %945 = vmatprep.mubr.f32.mxu0 0.0
  %v946 = vand.u32 %v617, 4294901760
  %v947 = vsub.f32 %v617, %v946
  %v948 = vand.u32 %v947, 4294901760
  %949 = vmatmul.mubr.f32.gmra.mrb[0].mxu0 %v948
  %v950 = vpop.f32.mrb[0].mxu0
  %v951 = vadd.f32 %v869, %v950
  %v952 = vpop.f32.mrb[0].mxu0
  %953 = vmatprep.mubr.f32.mxu0 0.0
  %v954 = vand.u32 %v620, 4294901760
  %v955 = vsub.f32 %v620, %v954
  %v956 = vand.u32 %v955, 4294901760
  %957 = vmatmul.mubr.f32.gmra.mrb[0].mxu0 %v956
  %v958 = vpop.f32.mrb[0].mxu0
  %v959 = vadd.f32 %v876, %v958
  %v960 = vpop.f32.mrb[0].mxu0
  %961 = vdwg.mxu0
  %962 = vmatprep.subr.mxu0 0.0
  %v963 = vand.u32 %v598, 4294901760
  %v964 = vsub.f32 %v598, %v963
  %v965 = vand.u32 %v964, 4294901760
  %966 = vmatpush1.msra.mxu0 %v965
  %967 = vmatprep.subr.mxu0 0.0
  %v968 = vand.u32 %v599, 4294901760
  %v969 = vsub.f32 %v599, %v968
  %v970 = vand.u32 %v969, 4294901760
  %971 = vmatpush1.msra.mxu0 %v970
  %972 = vmatprep.subr.mxu0 0.0
  %973 = vmatpush1.msra.mxu0 0.0
  %974 = vmatprep.subr.mxu0 0.0
  %975 = vmatpush1.msra.mxu0 0.0
  %976 = vmatprep.subr.mxu0 0.0
  %977 = vmatpush1.msra.mxu0 0.0
  %978 = vmatprep.subr.mxu0 0.0
  %979 = vmatpush1.msra.mxu0 0.0
  %980 = vmatprep.subr.mxu0 0.0
  %981 = vmatpush1.msra.mxu0 0.0
  %982 = vmatprep.subr.mxu0 0.0
  %983 = vmatpush1.msra.mxu0 0.0
  %984 = vmatprep.subr.mxu0 0.0
  %985 = vmatpush1.msra.mxu0 0.0
  %986 = vmatprep.subr.mxu0 0.0
  %987 = vmatpush1.msra.mxu0 0.0
  %988 = vmatprep.subr.mxu0 0.0
  %989 = vmatpush1.msra.mxu0 0.0
  %990 = vmatprep.subr.mxu0 0.0
  %991 = vmatpush1.msra.mxu0 0.0
  %992 = vmatprep.subr.mxu0 0.0
  %993 = vmatpush1.msra.mxu0 0.0
  %994 = vmatprep.subr.mxu0 0.0
  %995 = vmatpush1.msra.mxu0 0.0
  %996 = vmatprep.subr.mxu0 0.0
  %997 = vmatpush1.msra.mxu0 0.0
  %998 = vmatprep.subr.mxu0 0.0
  %999 = vmatpush1.msra.mxu0 0.0
  %1000 = vmatprep.subr.mxu0 0.0
  %1001 = vmatpush1.msra.mxu0 0.0
  %1002 = vmatprep.subr.mxu0 0.0
  %1003 = vmatpush1.msra.mxu0 0.0
  %1004 = vmatprep.subr.mxu0 0.0
  %1005 = vmatpush1.msra.mxu0 0.0
  %1006 = vmatprep.subr.mxu0 0.0
  %1007 = vmatpush1.msra.mxu0 0.0
  %1008 = vmatprep.subr.mxu0 0.0
  %1009 = vmatpush1.msra.mxu0 0.0
  %1010 = vmatprep.subr.mxu0 0.0
  %1011 = vmatpush1.msra.mxu0 0.0
  %1012 = vmatprep.subr.mxu0 0.0
  %1013 = vmatpush1.msra.mxu0 0.0
  %1014 = vmatprep.subr.mxu0 0.0
  %1015 = vmatpush1.msra.mxu0 0.0
  %1016 = vmatprep.subr.mxu0 0.0
  %1017 = vmatpush1.msra.mxu0 0.0
  %1018 = vmatprep.subr.mxu0 0.0
  %1019 = vmatpush1.msra.mxu0 0.0
  %1020 = vmatprep.subr.mxu0 0.0
  %1021 = vmatpush1.msra.mxu0 0.0
  %1022 = vmatprep.subr.mxu0 0.0
  %1023 = vmatpush1.msra.mxu0 0.0
  %1024 = vmatprep.subr.mxu0 0.0
  %1025 = vmatpush1.msra.mxu0 0.0
  %1026 = vmatprep.subr.mxu0 0.0
  %1027 = vmatpush1.msra.mxu0 0.0
  %1028 = vmatprep.subr.mxu0 0.0
  %1029 = vmatpush1.msra.mxu0 0.0
  %1030 = vmatprep.subr.mxu0 0.0
  %1031 = vmatpush1.msra.mxu0 0.0
  %1032 = vmatprep.mubr.f32.mxu0 0.0
  %v1033 = vand.u32 %v617, 4294901760
  %1034 = vmatmul.mubr.f32.gmra.mrb[0].mxu0 %v1033
  %v1035 = vpop.f32.mrb[0].mxu0
  %v1036 = vadd.f32 %v951, %v1035
  %v1037 = vpop.f32.mrb[0].mxu0
  %1038 = vmatprep.mubr.f32.mxu0 0.0
  %v1039 = vand.u32 %v620, 4294901760
  %1040 = vmatmul.mubr.f32.gmra.mrb[0].mxu0 %v1039
  %v1041 = vpop.f32.mrb[0].mxu0
  %v1042 = vadd.f32 %v959, %v1041
  %v1043 = vpop.f32.mrb[0].mxu0
  %1044 = vdwg.mxu0
  %1045 = vmatprep.subr.mxu0 0.0
  %v1046 = vand.u32 %v598, 4294901760
  %1047 = vmatpush1.msra.mxu0 %v1046
  %1048 = vmatprep.subr.mxu0 0.0
  %v1049 = vand.u32 %v599, 4294901760
  %1050 = vmatpush1.msra.mxu0 %v1049
  %1051 = vmatprep.subr.mxu0 0.0
  %1052 = vmatpush1.msra.mxu0 0.0
  %1053 = vmatprep.subr.mxu0 0.0
  %1054 = vmatpush1.msra.mxu0 0.0
  %1055 = vmatprep.subr.mxu0 0.0
  %1056 = vmatpush1.msra.mxu0 0.0
  %1057 = vmatprep.subr.mxu0 0.0
  %1058 = vmatpush1.msra.mxu0 0.0
  %1059 = vmatprep.subr.mxu0 0.0
  %1060 = vmatpush1.msra.mxu0 0.0
  %1061 = vmatprep.subr.mxu0 0.0
  %1062 = vmatpush1.msra.mxu0 0.0
  %1063 = vmatprep.subr.mxu0 0.0
  %1064 = vmatpush1.msra.mxu0 0.0
  %1065 = vmatprep.subr.mxu0 0.0
  %1066 = vmatpush1.msra.mxu0 0.0
  %1067 = vmatprep.subr.mxu0 0.0
  %1068 = vmatpush1.msra.mxu0 0.0
  %1069 = vmatprep.subr.mxu0 0.0
  %1070 = vmatpush1.msra.mxu0 0.0
  %1071 = vmatprep.subr.mxu0 0.0
  %1072 = vmatpush1.msra.mxu0 0.0
  %1073 = vmatprep.subr.mxu0 0.0
  %1074 = vmatpush1.msra.mxu0 0.0
  %1075 = vmatprep.subr.mxu0 0.0
  %1076 = vmatpush1.msra.mxu0 0.0
  %1077 = vmatprep.subr.mxu0 0.0
  %1078 = vmatpush1.msra.mxu0 0.0
  %1079 = vmatprep.subr.mxu0 0.0
  %1080 = vmatpush1.msra.mxu0 0.0
  %1081 = vmatprep.subr.mxu0 0.0
  %1082 = vmatpush1.msra.mxu0 0.0
  %1083 = vmatprep.subr.mxu0 0.0
  %1084 = vmatpush1.msra.mxu0 0.0
  %1085 = vmatprep.subr.mxu0 0.0
  %1086 = vmatpush1.msra.mxu0 0.0
  %1087 = vmatprep.subr.mxu0 0.0
  %1088 = vmatpush1.msra.mxu0 0.0
  %1089 = vmatprep.subr.mxu0 0.0
  %1090 = vmatpush1.msra.mxu0 0.0
  %1091 = vmatprep.subr.mxu0 0.0
  %1092 = vmatpush1.msra.mxu0 0.0
  %1093 = vmatprep.subr.mxu0 0.0
  %1094 = vmatpush1.msra.mxu0 0.0
  %1095 = vmatprep.subr.mxu0 0.0
  %1096 = vmatpush1.msra.mxu0 0.0
  %1097 = vmatprep.subr.mxu0 0.0
  %1098 = vmatpush1.msra.mxu0 0.0
  %1099 = vmatprep.subr.mxu0 0.0
  %1100 = vmatpush1.msra.mxu0 0.0
  %1101 = vmatprep.subr.mxu0 0.0
  %1102 = vmatpush1.msra.mxu0 0.0
  %1103 = vmatprep.subr.mxu0 0.0
  %1104 = vmatpush1.msra.mxu0 0.0
  %1105 = vmatprep.subr.mxu0 0.0
  %1106 = vmatpush1.msra.mxu0 0.0
  %1107 = vmatprep.subr.mxu0 0.0
  %1108 = vmatpush1.msra.mxu0 0.0
  %1109 = vmatprep.subr.mxu0 0.0
  %1110 = vmatpush1.msra.mxu0 0.0
  %1111 = vmatprep.mubr.f32.mxu0 0.0
  %v1112 = vand.u32 %v617, 4294901760
  %1113 = vmatmul.mubr.f32.gmra.mrb[0].mxu0 %v1112
  %v1114 = vpop.f32.mrb[0].mxu0
  %v1115 = vadd.f32 %v1036, %v1114
  %v1116 = vpop.f32.mrb[0].mxu0
  %1117 = vmatprep.mubr.f32.mxu0 0.0
  %v1118 = vand.u32 %v620, 4294901760
  %1119 = vmatmul.mubr.f32.gmra.mrb[0].mxu0 %v1118
  %v1120 = vpop.f32.mrb[0].mxu0
  %v1121 = vadd.f32 %v1042, %v1120
  %v1122 = vpop.f32.mrb[0].mxu0
  %1123 = vdwg.mxu0
  %v1124 = vtanh.pop %v1115
  %v1125 = vtanh.pop %v1121
  %s1126 = scalar_lea.vmem %s2, 48
  %v1127 = vld [vmem:[%s1126] sm:$0xff]
  %s1128 = scalar_lea.vmem %s3, 48
  %v1129 = vld [vmem:[%s1128] sm:$0xff]
  %1131 = vset.pattern.permute.xlu0 0
  %1132 = vperm.xlu0 %1131, %v1129
  %v1133 = vpop.permute.xlu0 %1132
  %v1136 = vsel %vm89, %v1127, 0
  %1138 = vmatprep.subr.mxu0 0.0
  %v1139 = vand.u32 %v1124, 4294901760
  %1140 = vmatpush1.msra.mxu0 %v1139
  %1141 = vmatprep.subr.mxu0 0.0
  %v1142 = vand.u32 %v1125, 4294901760
  %1143 = vmatpush1.msra.mxu0 %v1142
  %1144 = vmatprep.subr.mxu0 0.0
  %1145 = vmatpush1.msra.mxu0 0.0
  %1146 = vmatprep.subr.mxu0 0.0
  %1147 = vmatpush1.msra.mxu0 0.0
  %1148 = vmatprep.subr.mxu0 0.0
  %1149 = vmatpush1.msra.mxu0 0.0
  %1150 = vmatprep.subr.mxu0 0.0
  %1151 = vmatpush1.msra.mxu0 0.0
  %1152 = vmatprep.subr.mxu0 0.0
  %1153 = vmatpush1.msra.mxu0 0.0
  %1154 = vmatprep.subr.mxu0 0.0
  %1155 = vmatpush1.msra.mxu0 0.0
  %1156 = vmatprep.subr.mxu0 0.0
  %1157 = vmatpush1.msra.mxu0 0.0
  %1158 = vmatprep.subr.mxu0 0.0
  %1159 = vmatpush1.msra.mxu0 0.0
  %1160 = vmatprep.subr.mxu0 0.0
  %1161 = vmatpush1.msra.mxu0 0.0
  %1162 = vmatprep.subr.mxu0 0.0
  %1163 = vmatpush1.msra.mxu0 0.0
  %1164 = vmatprep.subr.mxu0 0.0
  %1165 = vmatpush1.msra.mxu0 0.0
  %1166 = vmatprep.subr.mxu0 0.0
  %1167 = vmatpush1.msra.mxu0 0.0
  %1168 = vmatprep.subr.mxu0 0.0
  %1169 = vmatpush1.msra.mxu0 0.0
  %1170 = vmatprep.subr.mxu0 0.0
  %1171 = vmatpush1.msra.mxu0 0.0
  %1172 = vmatprep.subr.mxu0 0.0
  %1173 = vmatpush1.msra.mxu0 0.0
  %1174 = vmatprep.subr.mxu0 0.0
  %1175 = vmatpush1.msra.mxu0 0.0
  %1176 = vmatprep.subr.mxu0 0.0
  %1177 = vmatpush1.msra.mxu0 0.0
  %1178 = vmatprep.subr.mxu0 0.0
  %1179 = vmatpush1.msra.mxu0 0.0
  %1180 = vmatprep.subr.mxu0 0.0
  %1181 = vmatpush1.msra.mxu0 0.0
  %1182 = vmatprep.subr.mxu0 0.0
  %1183 = vmatpush1.msra.mxu0 0.0
  %1184 = vmatprep.subr.mxu0 0.0
  %1185 = vmatpush1.msra.mxu0 0.0
  %1186 = vmatprep.subr.mxu0 0.0
  %1187 = vmatpush1.msra.mxu0 0.0
  %1188 = vmatprep.subr.mxu0 0.0
  %1189 = vmatpush1.msra.mxu0 0.0
  %1190 = vmatprep.subr.mxu0 0.0
  %1191 = vmatpush1.msra.mxu0 0.0
  %1192 = vmatprep.subr.mxu0 0.0
  %1193 = vmatpush1.msra.mxu0 0.0
  %1194 = vmatprep.subr.mxu0 0.0
  %1195 = vmatpush1.msra.mxu0 0.0
  %1196 = vmatprep.subr.mxu0 0.0
  %1197 = vmatpush1.msra.mxu0 0.0
  %1198 = vmatprep.subr.mxu0 0.0
  %1199 = vmatpush1.msra.mxu0 0.0
  %1200 = vmatprep.subr.mxu0 0.0
  %1201 = vmatpush1.msra.mxu0 0.0
  %1202 = vmatprep.subr.mxu0 0.0
  %1203 = vmatpush1.msra.mxu0 0.0
  %1204 = vmatprep.mubr.f32.mxu0 0.0
  %v1205 = vand.u32 %v1136, 4294901760
  %v1206 = vsub.f32 %v1136, %v1205
  %v1207 = vand.u32 %v1206, 4294901760
  %v1208 = vsub.f32 %v1206, %v1207
  %v1209 = vand.u32 %v1208, 4294901760
  %1210 = vmatmul.mubr.f32.gmra.mrb[0].mxu0 %v1209
  %v1211 = vpop.f32.mrb[0].mxu0
  %v1212 = vadd.f32 %v1133, %v1211
  %v1213 = vpop.f32.mrb[0].mxu0
  %1214 = vdwg.mxu0
  %1215 = vmatprep.subr.mxu0 0.0
  %v1216 = vand.u32 %v1124, 4294901760
  %v1217 = vsub.f32 %v1124, %v1216
  %v1218 = vand.u32 %v1217, 4294901760
  %v1219 = vsub.f32 %v1217, %v1218
  %v1220 = vand.u32 %v1219, 4294901760
  %1221 = vmatpush1.msra.mxu0 %v1220
  %1222 = vmatprep.subr.mxu0 0.0
  %v1223 = vand.u32 %v1125, 4294901760
  %v1224 = vsub.f32 %v1125, %v1223
  %v1225 = vand.u32 %v1224, 4294901760
  %v1226 = vsub.f32 %v1224, %v1225
  %v1227 = vand.u32 %v1226, 4294901760
  %1228 = vmatpush1.msra.mxu0 %v1227
  %1229 = vmatprep.subr.mxu0 0.0
  %1230 = vmatpush1.msra.mxu0 0.0
  %1231 = vmatprep.subr.mxu0 0.0
  %1232 = vmatpush1.msra.mxu0 0.0
  %1233 = vmatprep.subr.mxu0 0.0
  %1234 = vmatpush1.msra.mxu0 0.0
  %1235 = vmatprep.subr.mxu0 0.0
  %1236 = vmatpush1.msra.mxu0 0.0
  %1237 = vmatprep.subr.mxu0 0.0
  %1238 = vmatpush1.msra.mxu0 0.0
  %1239 = vmatprep.subr.mxu0 0.0
  %1240 = vmatpush1.msra.mxu0 0.0
  %1241 = vmatprep.subr.mxu0 0.0
  %1242 = vmatpush1.msra.mxu0 0.0
  %1243 = vmatprep.subr.mxu0 0.0
  %1244 = vmatpush1.msra.mxu0 0.0
  %1245 = vmatprep.subr.mxu0 0.0
  %1246 = vmatpush1.msra.mxu0 0.0
  %1247 = vmatprep.subr.mxu0 0.0
  %1248 = vmatpush1.msra.mxu0 0.0
  %1249 = vmatprep.subr.mxu0 0.0
  %1250 = vmatpush1.msra.mxu0 0.0
  %1251 = vmatprep.subr.mxu0 0.0
  %1252 = vmatpush1.msra.mxu0 0.0
  %1253 = vmatprep.subr.mxu0 0.0
  %1254 = vmatpush1.msra.mxu0 0.0
  %1255 = vmatprep.subr.mxu0 0.0
  %1256 = vmatpush1.msra.mxu0 0.0
  %1257 = vmatprep.subr.mxu0 0.0
  %1258 = vmatpush1.msra.mxu0 0.0
  %1259 = vmatprep.subr.mxu0 0.0
  %1260 = vmatpush1.msra.mxu0 0.0
  %1261 = vmatprep.subr.mxu0 0.0
  %1262 = vmatpush1.msra.mxu0 0.0
  %1263 = vmatprep.subr.mxu0 0.0
  %1264 = vmatpush1.msra.mxu0 0.0
  %1265 = vmatprep.subr.mxu0 0.0
  %1266 = vmatpush1.msra.mxu0 0.0
  %1267 = vmatprep.subr.mxu0 0.0
  %1268 = vmatpush1.msra.mxu0 0.0
  %1269 = vmatprep.subr.mxu0 0.0
  %1270 = vmatpush1.msra.mxu0 0.0
  %1271 = vmatprep.subr.mxu0 0.0
  %1272 = vmatpush1.msra.mxu0 0.0
  %1273 = vmatprep.subr.mxu0 0.0
  %1274 = vmatpush1.msra.mxu0 0.0
  %1275 = vmatprep.subr.mxu0 0.0
  %1276 = vmatpush1.msra.mxu0 0.0
  %1277 = vmatprep.subr.mxu0 0.0
  %1278 = vmatpush1.msra.mxu0 0.0
  %1279 = vmatprep.subr.mxu0 0.0
  %1280 = vmatpush1.msra.mxu0 0.0
  %1281 = vmatprep.subr.mxu0 0.0
  %1282 = vmatpush1.msra.mxu0 0.0
  %1283 = vmatprep.subr.mxu0 0.0
  %1284 = vmatpush1.msra.mxu0 0.0
  %1285 = vmatprep.subr.mxu0 0.0
  %1286 = vmatpush1.msra.mxu0 0.0
  %1287 = vmatprep.subr.mxu0 0.0
  %1288 = vmatpush1.msra.mxu0 0.0
  %1289 = vmatprep.mubr.f32.mxu0 0.0
  %v1290 = vand.u32 %v1136, 4294901760
  %1291 = vmatmul.mubr.f32.gmra.mrb[0].mxu0 %v1290
  %v1292 = vpop.f32.mrb[0].mxu0
  %v1293 = vadd.f32 %v1212, %v1292
  %v1294 = vpop.f32.mrb[0].mxu0
  %1295 = vdwg.mxu0
  %1296 = vmatprep.subr.mxu0 0.0
  %v1297 = vand.u32 %v1124, 4294901760
  %v1298 = vsub.f32 %v1124, %v1297
  %1299 = vmatpush1.msra.mxu0 %v1298
  %1300 = vmatprep.subr.mxu0 0.0
  %v1301 = vand.u32 %v1125, 4294901760
  %v1302 = vsub.f32 %v1125, %v1301
  %1303 = vmatpush1.msra.mxu0 %v1302
  %1304 = vmatprep.subr.mxu0 0.0
  %1305 = vmatpush1.msra.mxu0 0.0
  %1306 = vmatprep.subr.mxu0 0.0
  %1307 = vmatpush1.msra.mxu0 0.0
  %1308 = vmatprep.subr.mxu0 0.0
  %1309 = vmatpush1.msra.mxu0 0.0
  %1310 = vmatprep.subr.mxu0 0.0
  %1311 = vmatpush1.msra.mxu0 0.0
  %1312 = vmatprep.subr.mxu0 0.0
  %1313 = vmatpush1.msra.mxu0 0.0
  %1314 = vmatprep.subr.mxu0 0.0
  %1315 = vmatpush1.msra.mxu0 0.0
  %1316 = vmatprep.subr.mxu0 0.0
  %1317 = vmatpush1.msra.mxu0 0.0
  %1318 = vmatprep.subr.mxu0 0.0
  %1319 = vmatpush1.msra.mxu0 0.0
  %1320 = vmatprep.subr.mxu0 0.0
  %1321 = vmatpush1.msra.mxu0 0.0
  %1322 = vmatprep.subr.mxu0 0.0
  %1323 = vmatpush1.msra.mxu0 0.0
  %1324 = vmatprep.subr.mxu0 0.0
  %1325 = vmatpush1.msra.mxu0 0.0
  %1326 = vmatprep.subr.mxu0 0.0
  %1327 = vmatpush1.msra.mxu0 0.0
  %1328 = vmatprep.subr.mxu0 0.0
  %1329 = vmatpush1.msra.mxu0 0.0
  %1330 = vmatprep.subr.mxu0 0.0
  %1331 = vmatpush1.msra.mxu0 0.0
  %1332 = vmatprep.subr.mxu0 0.0
  %1333 = vmatpush1.msra.mxu0 0.0
  %1334 = vmatprep.subr.mxu0 0.0
  %1335 = vmatpush1.msra.mxu0 0.0
  %1336 = vmatprep.subr.mxu0 0.0
  %1337 = vmatpush1.msra.mxu0 0.0
  %1338 = vmatprep.subr.mxu0 0.0
  %1339 = vmatpush1.msra.mxu0 0.0
  %1340 = vmatprep.subr.mxu0 0.0
  %1341 = vmatpush1.msra.mxu0 0.0
  %1342 = vmatprep.subr.mxu0 0.0
  %1343 = vmatpush1.msra.mxu0 0.0
  %1344 = vmatprep.subr.mxu0 0.0
  %1345 = vmatpush1.msra.mxu0 0.0
  %1346 = vmatprep.subr.mxu0 0.0
  %1347 = vmatpush1.msra.mxu0 0.0
  %1348 = vmatprep.subr.mxu0 0.0
  %1349 = vmatpush1.msra.mxu0 0.0
  %1350 = vmatprep.subr.mxu0 0.0
  %1351 = vmatpush1.msra.mxu0 0.0
  %1352 = vmatprep.subr.mxu0 0.0
  %1353 = vmatpush1.msra.mxu0 0.0
  %1354 = vmatprep.subr.mxu0 0.0
  %1355 = vmatpush1.msra.mxu0 0.0
  %1356 = vmatprep.subr.mxu0 0.0
  %1357 = vmatpush1.msra.mxu0 0.0
  %1358 = vmatprep.subr.mxu0 0.0
  %1359 = vmatpush1.msra.mxu0 0.0
  %1360 = vmatprep.subr.mxu0 0.0
  %1361 = vmatpush1.msra.mxu0 0.0
  %1362 = vmatprep.subr.mxu0 0.0
  %1363 = vmatpush1.msra.mxu0 0.0
  %1364 = vmatprep.mubr.f32.mxu0 0.0
  %v1365 = vand.u32 %v1136, 4294901760
  %v1366 = vsub.f32 %v1136, %v1365
  %1367 = vmatmul.mubr.f32.gmra.mrb[0].mxu0 %v1366
  %v1368 = vpop.f32.mrb[0].mxu0
  %v1369 = vadd.f32 %v1293, %v1368
  %v1370 = vpop.f32.mrb[0].mxu0
  %1371 = vdwg.mxu0
  %1372 = vmatprep.subr.mxu0 0.0
  %v1373 = vand.u32 %v1124, 4294901760
  %1374 = vmatpush1.msra.mxu0 %v1373
  %1375 = vmatprep.subr.mxu0 0.0
  %v1376 = vand.u32 %v1125, 4294901760
  %1377 = vmatpush1.msra.mxu0 %v1376
  %1378 = vmatprep.subr.mxu0 0.0
  %1379 = vmatpush1.msra.mxu0 0.0
  %1380 = vmatprep.subr.mxu0 0.0
  %1381 = vmatpush1.msra.mxu0 0.0
  %1382 = vmatprep.subr.mxu0 0.0
  %1383 = vmatpush1.msra.mxu0 0.0
  %1384 = vmatprep.subr.mxu0 0.0
  %1385 = vmatpush1.msra.mxu0 0.0
  %1386 = vmatprep.subr.mxu0 0.0
  %1387 = vmatpush1.msra.mxu0 0.0
  %1388 = vmatprep.subr.mxu0 0.0
  %1389 = vmatpush1.msra.mxu0 0.0
  %1390 = vmatprep.subr.mxu0 0.0
  %1391 = vmatpush1.msra.mxu0 0.0
  %1392 = vmatprep.subr.mxu0 0.0
  %1393 = vmatpush1.msra.mxu0 0.0
  %1394 = vmatprep.subr.mxu0 0.0
  %1395 = vmatpush1.msra.mxu0 0.0
  %1396 = vmatprep.subr.mxu0 0.0
  %1397 = vmatpush1.msra.mxu0 0.0
  %1398 = vmatprep.subr.mxu0 0.0
  %1399 = vmatpush1.msra.mxu0 0.0
  %1400 = vmatprep.subr.mxu0 0.0
  %1401 = vmatpush1.msra.mxu0 0.0
  %1402 = vmatprep.subr.mxu0 0.0
  %1403 = vmatpush1.msra.mxu0 0.0
  %1404 = vmatprep.subr.mxu0 0.0
  %1405 = vmatpush1.msra.mxu0 0.0
  %1406 = vmatprep.subr.mxu0 0.0
  %1407 = vmatpush1.msra.mxu0 0.0
  %1408 = vmatprep.subr.mxu0 0.0
  %1409 = vmatpush1.msra.mxu0 0.0
  %1410 = vmatprep.subr.mxu0 0.0
  %1411 = vmatpush1.msra.mxu0 0.0
  %1412 = vmatprep.subr.mxu0 0.0
  %1413 = vmatpush1.msra.mxu0 0.0
  %1414 = vmatprep.subr.mxu0 0.0
  %1415 = vmatpush1.msra.mxu0 0.0
  %1416 = vmatprep.subr.mxu0 0.0
  %1417 = vmatpush1.msra.mxu0 0.0
  %1418 = vmatprep.subr.mxu0 0.0
  %1419 = vmatpush1.msra.mxu0 0.0
  %1420 = vmatprep.subr.mxu0 0.0
  %1421 = vmatpush1.msra.mxu0 0.0
  %1422 = vmatprep.subr.mxu0 0.0
  %1423 = vmatpush1.msra.mxu0 0.0
  %1424 = vmatprep.subr.mxu0 0.0
  %1425 = vmatpush1.msra.mxu0 0.0
  %1426 = vmatprep.subr.mxu0 0.0
  %1427 = vmatpush1.msra.mxu0 0.0
  %1428 = vmatprep.subr.mxu0 0.0
  %1429 = vmatpush1.msra.mxu0 0.0
  %1430 = vmatprep.subr.mxu0 0.0
  %1431 = vmatpush1.msra.mxu0 0.0
  %1432 = vmatprep.subr.mxu0 0.0
  %1433 = vmatpush1.msra.mxu0 0.0
  %1434 = vmatprep.subr.mxu0 0.0
  %1435 = vmatpush1.msra.mxu0 0.0
  %1436 = vmatprep.subr.mxu0 0.0
  %1437 = vmatpush1.msra.mxu0 0.0
  %1438 = vmatprep.mubr.f32.mxu0 0.0
  %v1439 = vand.u32 %v1136, 4294901760
  %v1440 = vsub.f32 %v1136, %v1439
  %v1441 = vand.u32 %v1440, 4294901760
  %1442 = vmatmul.mubr.f32.gmra.mrb[0].mxu0 %v1441
  %v1443 = vpop.f32.mrb[0].mxu0
  %v1444 = vadd.f32 %v1369, %v1443
  %v1445 = vpop.f32.mrb[0].mxu0
  %1446 = vdwg.mxu0
  %1447 = vmatprep.subr.mxu0 0.0
  %v1448 = vand.u32 %v1124, 4294901760
  %v1449 = vsub.f32 %v1124, %v1448
  %v1450 = vand.u32 %v1449, 4294901760
  %1451 = vmatpush1.msra.mxu0 %v1450
  %1452 = vmatprep.subr.mxu0 0.0
  %v1453 = vand.u32 %v1125, 4294901760
  %v1454 = vsub.f32 %v1125, %v1453
  %v1455 = vand.u32 %v1454, 4294901760
  %1456 = vmatpush1.msra.mxu0 %v1455
  %1457 = vmatprep.subr.mxu0 0.0
  %1458 = vmatpush1.msra.mxu0 0.0
  %1459 = vmatprep.subr.mxu0 0.0
  %1460 = vmatpush1.msra.mxu0 0.0
  %1461 = vmatprep.subr.mxu0 0.0
  %1462 = vmatpush1.msra.mxu0 0.0
  %1463 = vmatprep.subr.mxu0 0.0
  %1464 = vmatpush1.msra.mxu0 0.0
  %1465 = vmatprep.subr.mxu0 0.0
  %1466 = vmatpush1.msra.mxu0 0.0
  %1467 = vmatprep.subr.mxu0 0.0
  %1468 = vmatpush1.msra.mxu0 0.0
  %1469 = vmatprep.subr.mxu0 0.0
  %1470 = vmatpush1.msra.mxu0 0.0
  %1471 = vmatprep.subr.mxu0 0.0
  %1472 = vmatpush1.msra.mxu0 0.0
  %1473 = vmatprep.subr.mxu0 0.0
  %1474 = vmatpush1.msra.mxu0 0.0
  %1475 = vmatprep.subr.mxu0 0.0
  %1476 = vmatpush1.msra.mxu0 0.0
  %1477 = vmatprep.subr.mxu0 0.0
  %1478 = vmatpush1.msra.mxu0 0.0
  %1479 = vmatprep.subr.mxu0 0.0
  %1480 = vmatpush1.msra.mxu0 0.0
  %1481 = vmatprep.subr.mxu0 0.0
  %1482 = vmatpush1.msra.mxu0 0.0
  %1483 = vmatprep.subr.mxu0 0.0
  %1484 = vmatpush1.msra.mxu0 0.0
  %1485 = vmatprep.subr.mxu0 0.0
  %1486 = vmatpush1.msra.mxu0 0.0
  %1487 = vmatprep.subr.mxu0 0.0
  %1488 = vmatpush1.msra.mxu0 0.0
  %1489 = vmatprep.subr.mxu0 0.0
  %1490 = vmatpush1.msra.mxu0 0.0
  %1491 = vmatprep.subr.mxu0 0.0
  %1492 = vmatpush1.msra.mxu0 0.0
  %1493 = vmatprep.subr.mxu0 0.0
  %1494 = vmatpush1.msra.mxu0 0.0
  %1495 = vmatprep.subr.mxu0 0.0
  %1496 = vmatpush1.msra.mxu0 0.0
  %1497 = vmatprep.subr.mxu0 0.0
  %1498 = vmatpush1.msra.mxu0 0.0
  %1499 = vmatprep.subr.mxu0 0.0
  %1500 = vmatpush1.msra.mxu0 0.0
  %1501 = vmatprep.subr.mxu0 0.0
  %1502 = vmatpush1.msra.mxu0 0.0
  %1503 = vmatprep.subr.mxu0 0.0
  %1504 = vmatpush1.msra.mxu0 0.0
  %1505 = vmatprep.subr.mxu0 0.0
  %1506 = vmatpush1.msra.mxu0 0.0
  %1507 = vmatprep.subr.mxu0 0.0
  %1508 = vmatpush1.msra.mxu0 0.0
  %1509 = vmatprep.subr.mxu0 0.0
  %1510 = vmatpush1.msra.mxu0 0.0
  %1511 = vmatprep.subr.mxu0 0.0
  %1512 = vmatpush1.msra.mxu0 0.0
  %1513 = vmatprep.subr.mxu0 0.0
  %1514 = vmatpush1.msra.mxu0 0.0
  %1515 = vmatprep.subr.mxu0 0.0
  %1516 = vmatpush1.msra.mxu0 0.0
  %1517 = vmatprep.mubr.f32.mxu0 0.0
  %v1518 = vand.u32 %v1136, 4294901760
  %1519 = vmatmul.mubr.f32.gmra.mrb[0].mxu0 %v1518
  %v1520 = vpop.f32.mrb[0].mxu0
  %v1521 = vadd.f32 %v1444, %v1520
  %v1522 = vpop.f32.mrb[0].mxu0
  %1523 = vdwg.mxu0
  %1524 = vmatprep.subr.mxu0 0.0
  %v1525 = vand.u32 %v1124, 4294901760
  %1526 = vmatpush1.msra.mxu0 %v1525
  %1527 = vmatprep.subr.mxu0 0.0
  %v1528 = vand.u32 %v1125, 4294901760
  %1529 = vmatpush1.msra.mxu0 %v1528
  %1530 = vmatprep.subr.mxu0 0.0
  %1531 = vmatpush1.msra.mxu0 0.0
  %1532 = vmatprep.subr.mxu0 0.0
  %1533 = vmatpush1.msra.mxu0 0.0
  %1534 = vmatprep.subr.mxu0 0.0
  %1535 = vmatpush1.msra.mxu0 0.0
  %1536 = vmatprep.subr.mxu0 0.0
  %1537 = vmatpush1.msra.mxu0 0.0
  %1538 = vmatprep.subr.mxu0 0.0
  %1539 = vmatpush1.msra.mxu0 0.0
  %1540 = vmatprep.subr.mxu0 0.0
  %1541 = vmatpush1.msra.mxu0 0.0
  %1542 = vmatprep.subr.mxu0 0.0
  %1543 = vmatpush1.msra.mxu0 0.0
  %1544 = vmatprep.subr.mxu0 0.0
  %1545 = vmatpush1.msra.mxu0 0.0
  %1546 = vmatprep.subr.mxu0 0.0
  %1547 = vmatpush1.msra.mxu0 0.0
  %1548 = vmatprep.subr.mxu0 0.0
  %1549 = vmatpush1.msra.mxu0 0.0
  %1550 = vmatprep.subr.mxu0 0.0
  %1551 = vmatpush1.msra.mxu0 0.0
  %1552 = vmatprep.subr.mxu0 0.0
  %1553 = vmatpush1.msra.mxu0 0.0
  %1554 = vmatprep.subr.mxu0 0.0
  %1555 = vmatpush1.msra.mxu0 0.0
  %1556 = vmatprep.subr.mxu0 0.0
  %1557 = vmatpush1.msra.mxu0 0.0
  %1558 = vmatprep.subr.mxu0 0.0
  %1559 = vmatpush1.msra.mxu0 0.0
  %1560 = vmatprep.subr.mxu0 0.0
  %1561 = vmatpush1.msra.mxu0 0.0
  %1562 = vmatprep.subr.mxu0 0.0
  %1563 = vmatpush1.msra.mxu0 0.0
  %1564 = vmatprep.subr.mxu0 0.0
  %1565 = vmatpush1.msra.mxu0 0.0
  %1566 = vmatprep.subr.mxu0 0.0
  %1567 = vmatpush1.msra.mxu0 0.0
  %1568 = vmatprep.subr.mxu0 0.0
  %1569 = vmatpush1.msra.mxu0 0.0
  %1570 = vmatprep.subr.mxu0 0.0
  %1571 = vmatpush1.msra.mxu0 0.0
  %1572 = vmatprep.subr.mxu0 0.0
  %1573 = vmatpush1.msra.mxu0 0.0
  %1574 = vmatprep.subr.mxu0 0.0
  %1575 = vmatpush1.msra.mxu0 0.0
  %1576 = vmatprep.subr.mxu0 0.0
  %1577 = vmatpush1.msra.mxu0 0.0
  %1578 = vmatprep.subr.mxu0 0.0
  %1579 = vmatpush1.msra.mxu0 0.0
  %1580 = vmatprep.subr.mxu0 0.0
  %1581 = vmatpush1.msra.mxu0 0.0
  %1582 = vmatprep.subr.mxu0 0.0
  %1583 = vmatpush1.msra.mxu0 0.0
  %1584 = vmatprep.subr.mxu0 0.0
  %1585 = vmatpush1.msra.mxu0 0.0
  %1586 = vmatprep.subr.mxu0 0.0
  %1587 = vmatpush1.msra.mxu0 0.0
  %1588 = vmatprep.subr.mxu0 0.0
  %1589 = vmatpush1.msra.mxu0 0.0
  %1590 = vmatprep.mubr.f32.mxu0 0.0
  %v1591 = vand.u32 %v1136, 4294901760
  %1592 = vmatmul.mubr.f32.gmra.mrb[0].mxu0 %v1591
  %v1593 = vpop.f32.mrb[0].mxu0
  %v1594 = vadd.f32 %v1521, %v1593
  %v1595 = vpop.f32.mrb[0].mxu0
  %1596 = vdwg.mxu0
  %1597 = vst [vmem:[%s4] sm:$0x1] %v1594
  // Predicated region
  $region18: #{pinn_forward.1} parent=0 // pred_check
    _
  $region19: #{pinn_forward.1} parent=0 // pred_check_branch
    %1599 = sbr.rel (0) target = $region21
  $region20: #{pinn_forward.1} parent=0 // pred_region
    _
  $region21: #{pinn_forward.1} parent=0 // pred_fallthru
    _
  // Predicated region
  $region22: #{pinn_forward.1} parent=0 // pred_check
    _
  $region23: #{pinn_forward.1} parent=0 // pred_check_branch
    %1601 = sbr.rel (0) target = $region25
  $region24: #{pinn_forward.1} parent=0 // pred_region
    _
  $region25: #{pinn_forward.1} parent=0 // pred_fallthru
    _

</llo_original>
